<compile_context>
chip_gen: v5e
topology: v5e:2x2
jax: 0.10.0
libtpu: 0.0.40
codegen_flags: <defaults>
</compile_context>

<pallas_src>
import functools

import jax
import jax.numpy as jnp
from jax.experimental import pallas as pl
from jax.experimental.pallas import tpu as pltpu

HIDDEN = 32          # hidden_size
VOCAB = 64           # output_size
LANES = 128          # lane width; each gate gets its own 128-lane block
GATES = 3 * LANES    # packed gate width (r | z | n), vreg-aligned
NEG = -1.0e30        # bias for padded vocab lanes -> exp underflows to 0


def _decoder_kernel(n_steps, t_pad,
                    tok_ref,      # (T_pad, 1)  int32  token ids
                    emb_ref,      # (V, H)      f32    embedding table (resident)
                    h0_ref,       # (1, 128)    f32    initial hidden, lane-padded
                    wih_ref,      # (H, 384)    f32    x -> gates, gate-aligned
                    whh_ref,      # (128, 384)  f32    h -> gates, gate-aligned
                    wout_ref,     # (128, 128)  f32    h -> logits, lane-padded
                    b_ref,        # (8, 384)    f32    bias slab
                    logp_ref,     # out (T_pad, 128)   log-probs (lane-dense)
                    hout_ref,     # out (1, 128)       final hidden
                    gi_sc,        # VMEM (T_pad, 384)  precomputed input-path gates
                    hall_sc):     # VMEM (T_pad, 128)  per-step hidden states
    f32 = jnp.float32

    # ---------- prologue (parallel over T): embedding + ReLU + input projection
    tok = tok_ref[...]                                              # (T_pad, 1)
    vocab_ids = jax.lax.broadcasted_iota(jnp.int32, (t_pad, VOCAB), 1)
    onehot = (vocab_ids == tok).astype(f32)                         # (T_pad, V)
    x = jnp.dot(onehot, emb_ref[...], preferred_element_type=f32)   # (T_pad, H)
    x = jnp.maximum(x, 0.0)                                         # ReLU
    # gi = x @ W_ih^T + (b_ih with r/z entries pre-folded with b_hh's r/z)
    gi_sc[...] = jnp.dot(x, wih_ref[...], preferred_element_type=f32) + b_ref[0:1, :]

    if t_pad > n_steps:
        # keep never-written (padding) rows finite for the batched epilogue
        hall_sc[...] = jnp.zeros_like(hall_sc)

    # ---------- serial recurrence (only h -> gates matmul + gate math per step)
    whh = whh_ref[...]                 # hoisted: stays in vregs across the loop
    b_hn = b_ref[1:2, 0:LANES]         # b_hn, r-scaled inside the n gate

    h = h0_ref[...]                    # (1, 128); padded lanes stay exactly 0
    for t in range(n_steps):           # fully unrolled (T is static & small)
        gi = gi_sc[t:t + 1, :]                                       # (1, 384)
        gh = jnp.dot(h, whh, preferred_element_type=f32)             # (1, 384)
        r = jax.nn.sigmoid(gi[:, 0:LANES] + gh[:, 0:LANES])
        z = jax.nn.sigmoid(gi[:, LANES:2 * LANES] + gh[:, LANES:2 * LANES])
        n = jnp.tanh(gi[:, 2 * LANES:] + r * (gh[:, 2 * LANES:] + b_hn))
        h = (1.0 - z) * n + z * h
        hall_sc[t:t + 1, :] = h
    hout_ref[...] = h

    # ---------- epilogue (parallel over T): output projection + log-softmax
    logits = jnp.dot(hall_sc[...], wout_ref[...],
                     preferred_element_type=f32) + b_ref[2:3, 0:LANES]
    m = jnp.max(logits, axis=-1, keepdims=True)
    lse = jnp.log(jnp.sum(jnp.exp(logits - m), axis=-1, keepdims=True)) + m
    logp_ref[...] = logits - lse                                     # dense store


def _prep_params(params):
    """Pack params into gate-aligned, lane-dense f32 slabs (host side, once)."""
    H, V, L = HIDDEN, VOCAB, LANES
    f32 = jnp.float32
    wih = params["w_ih"].astype(f32)          # (3H, H), rows in [r, z, n] order
    whh = params["w_hh"].astype(f32)
    bih = params["b_ih"].astype(f32)
    bhh = params["b_hh"].astype(f32)
    wout = params["w_out"].astype(f32)        # (V, H)
    bout = params["b_out"].astype(f32)

    wih_p = jnp.zeros((H, 3 * L), f32)        # each gate in its own 128-lane block
    whh_p = jnp.zeros((L, 3 * L), f32)        # rows H..127 are zero (padded h lanes)
    for g in range(3):
        wih_p = wih_p.at[:, g * L:g * L + H].set(wih[g * H:(g + 1) * H, :].T)
        whh_p = whh_p.at[:H, g * L:g * L + H].set(whh[g * H:(g + 1) * H, :].T)

    wout_p = jnp.zeros((L, L), f32).at[:H, :V].set(wout.T)

    b_slab = jnp.zeros((8, 3 * L), f32)
    # row 0: folded input-path gate biases (r: b_ir+b_hr | z: b_iz+b_hz | n: b_in)
    b_slab = b_slab.at[0, 0:H].set(bih[0:H] + bhh[0:H])
    b_slab = b_slab.at[0, L:L + H].set(bih[H:2 * H] + bhh[H:2 * H])
    b_slab = b_slab.at[0, 2 * L:2 * L + H].set(bih[2 * H:3 * H])
    # row 1: b_hn (kept separate, multiplied by r in the recurrence)
    b_slab = b_slab.at[1, 0:H].set(bhh[2 * H:3 * H])
    # row 2: output bias; padded vocab lanes masked with -1e30 (their weight
    # columns are exactly zero, so exp cleanly underflows -> no NaN)
    b_slab = b_slab.at[2, 0:L].set(jnp.full((L,), NEG, f32))
    b_slab = b_slab.at[2, 0:V].set(bout)
    return wih_p, whh_p, wout_p, b_slab


def decoder_rnn_forward(tokens, hidden, params):
    """Run the decoder for a whole token sequence in ONE pallas_call.

    tokens: int (T,)   hidden: float32 (1, 1, H)
    returns (log_probs (T, V), final hidden (1, 1, H)); each step reproduces
    exactly one forward() of the PyTorch module.
    """
    tokens = tokens.astype(jnp.int32).reshape(-1)
    T = int(tokens.shape[0])
    T_pad = max(8, ((T + 7) // 8) * 8)        # sublane-dense slabs / stores

    tok_col = jnp.zeros((T_pad, 1), jnp.int32).at[:T, 0].set(tokens)
    h0p = jnp.zeros((1, LANES), jnp.float32).at[0, :HIDDEN].set(
        hidden.reshape(-1).astype(jnp.float32))
    emb = params["embedding"].astype(jnp.float32)
    wih_p, whh_p, wout_p, b_slab = _prep_params(params)

    kernel = functools.partial(_decoder_kernel, T, T_pad)

    grid_spec = pltpu.PrefetchScalarGridSpec(
        num_scalar_prefetch=0,
        grid=(1,),                            # single step: everything resident
        in_specs=[
            pl.BlockSpec((T_pad, 1), lambda i: (0, 0)),
            pl.BlockSpec((VOCAB, HIDDEN), lambda i: (0, 0)),
            pl.BlockSpec((1, LANES), lambda i: (0, 0)),
            pl.BlockSpec((HIDDEN, GATES), lambda i: (0, 0)),
            pl.BlockSpec((LANES, GATES), lambda i: (0, 0)),
            pl.BlockSpec((LANES, LANES), lambda i: (0, 0)),
            pl.BlockSpec((8, GATES), lambda i: (0, 0)),
        ],
        out_specs=(
            pl.BlockSpec((T_pad, LANES), lambda i: (0, 0)),
            pl.BlockSpec((1, LANES), lambda i: (0, 0)),
        ),
        scratch_shapes=[
            pltpu.VMEM((T_pad, GATES), jnp.float32),   # gi slab (input path)
            pltpu.VMEM((T_pad, LANES), jnp.float32),   # per-step hidden states
        ],
    )

    logp_pad, h_out = pl.pallas_call(
        kernel,
        out_shape=(jax.ShapeDtypeStruct((T_pad, LANES), jnp.float32),
                   jax.ShapeDtypeStruct((1, LANES), jnp.float32)),
        grid_spec=grid_spec,
        compiler_params=pltpu.CompilerParams(
            dimension_semantics=("arbitrary",)),       # serial recurrence inside
    )(tok_col, emb, h0p, wih_p, whh_p, wout_p, b_slab)

    return logp_pad[:T, :VOCAB], h_out[:, :HIDDEN].reshape(1, 1, HIDDEN)


def decoder_rnn_step(token, hidden, params):
    """Exact one-step equivalent of the PyTorch module's forward()."""
    logp, h = decoder_rnn_forward(token.reshape(-1)[:1], hidden, params)
    return logp, h


def init_params(key):
    """Deterministic parameter init, same shapes as the PyTorch module."""
    ks = jax.random.split(key, 7)
    bound = 1.0 / jnp.sqrt(HIDDEN)
    u = lambda k, shape: jax.random.uniform(k, shape, jnp.float32, -bound, bound)
    return {
        "embedding": jax.random.normal(ks[0], (VOCAB, HIDDEN), jnp.float32),
        "w_ih": u(ks[1], (3 * HIDDEN, HIDDEN)),
        "w_hh": u(ks[2], (3 * HIDDEN, HIDDEN)),
        "b_ih": u(ks[3], (3 * HIDDEN,)),
        "b_hh": u(ks[4], (3 * HIDDEN,)),
        "w_out": u(ks[5], (VOCAB, HIDDEN)),
        "b_out": u(ks[6], (VOCAB,)),
    }


def _reference_step(token, h, params):
    """Pure-JAX mirror of one PyTorch forward() call."""
    x = jnp.maximum(params["embedding"][token].reshape(1, HIDDEN), 0.0)
    gi = x @ params["w_ih"].T + params["b_ih"]
    gh = h @ params["w_hh"].T + params["b_hh"]
    i_r, i_z, i_n = jnp.split(gi, 3, axis=1)
    h_r, h_z, h_n = jnp.split(gh, 3, axis=1)
    r = jax.nn.sigmoid(i_r + h_r)
    z = jax.nn.sigmoid(i_z + h_z)
    n = jnp.tanh(i_n + r * h_n)
    h_new = (1.0 - z) * n + z * h
    logits = h_new @ params["w_out"].T + params["b_out"]
    return jax.nn.log_softmax(logits, axis=1), h_new


def reference_forward(tokens, hidden, params):
    h = hidden.reshape(1, HIDDEN)
    outs = []
    for t in range(tokens.shape[0]):
        lp, h = _reference_step(tokens[t], h, params)
        outs.append(lp)
    return jnp.concatenate(outs, axis=0), h.reshape(1, 1, HIDDEN)


if __name__ == "__main__":
    key = jax.random.PRNGKey(0)
    params = init_params(key)

    # multi-step decode: one pallas_call, recurrence fully inside the kernel
    T = 8
    tokens = jax.random.randint(jax.random.PRNGKey(1), (T,), 0, VOCAB, dtype=jnp.int32)
    hidden = jnp.zeros((1, 1, HIDDEN), jnp.float32)   # initHidden()

    logp, h_final = decoder_rnn_forward(tokens, hidden, params)
    jax.block_until_ready((logp, h_final))

    ref_logp, ref_h = reference_forward(tokens, hidden, params)
    assert jnp.allclose(logp, ref_logp, atol=1e-4), "log-softmax mismatch (multi-step)"
    assert jnp.allclose(h_final, ref_h, atol=1e-4), "hidden-state mismatch (multi-step)"

    # single-step call: exact semantics of the original module's forward()
    token = jnp.array([5], dtype=jnp.int32)
    lp1, h1 = decoder_rnn_step(token, hidden, params)
    jax.block_until_ready((lp1, h1))
    ref_lp1, ref_h1 = reference_forward(token, hidden, params)
    assert jnp.allclose(lp1, ref_lp1, atol=1e-4), "log-softmax mismatch (single step)"
    assert jnp.allclose(h1, ref_h1, atol=1e-4), "hidden-state mismatch (single step)"

    print("KERNEL_OK")
</pallas_src>

<mosaic_0001>
module attributes {stable_mosaic.version = 11 : i64} {
  func.func @_decoder_kernel(%arg0: i32, %arg1: memref<8x1xi32, #tpu.memory_space<vmem>>, %arg2: memref<64x32xf32, #tpu.memory_space<vmem>>, %arg3: memref<1x128xf32, #tpu.memory_space<vmem>>, %arg4: memref<32x384xf32, #tpu.memory_space<vmem>>, %arg5: memref<128x384xf32, #tpu.memory_space<vmem>>, %arg6: memref<128x128xf32, #tpu.memory_space<vmem>>, %arg7: memref<8x384xf32, #tpu.memory_space<vmem>>, %arg8: memref<8x128xf32, #tpu.memory_space<vmem>>, %arg9: memref<1x128xf32, #tpu.memory_space<vmem>>, %arg10: memref<8x384xf32, #tpu.memory_space<vmem>>, %arg11: memref<8x128xf32, #tpu.memory_space<vmem>>) attributes {dimension_semantics = [#tpu.dimension_semantics<arbitrary>], iteration_bounds = array<i64: 1>, scalar_prefetch = 0 : i64, scratch_operands = 2 : i64, tpu.core_type = #tpu.core_type<tc>, window_params = [{pipeline_mode = #tpu.pipeline_mode<synchronous>, transform_indices = @transform_0, window_bounds = array<i64: 8, 1>}, {pipeline_mode = #tpu.pipeline_mode<synchronous>, transform_indices = @transform_1, window_bounds = array<i64: 64, 32>}, {pipeline_mode = #tpu.pipeline_mode<synchronous>, transform_indices = @transform_2, window_bounds = array<i64: 1, 128>}, {pipeline_mode = #tpu.pipeline_mode<synchronous>, transform_indices = @transform_3, window_bounds = array<i64: 32, 384>}, {pipeline_mode = #tpu.pipeline_mode<synchronous>, transform_indices = @transform_4, window_bounds = array<i64: 128, 384>}, {pipeline_mode = #tpu.pipeline_mode<synchronous>, transform_indices = @transform_5, window_bounds = array<i64: 128, 128>}, {pipeline_mode = #tpu.pipeline_mode<synchronous>, transform_indices = @transform_6, window_bounds = array<i64: 8, 384>}, {pipeline_mode = #tpu.pipeline_mode<synchronous>, transform_indices = @transform_7, window_bounds = array<i64: 8, 128>}, {pipeline_mode = #tpu.pipeline_mode<synchronous>, transform_indices = @transform_8, window_bounds = array<i64: 1, 128>}]} {
    %c0 = arith.constant 0 : index
    %c0_0 = arith.constant 0 : index
    %0 = vector.load %arg1[%c0, %c0_0] : memref<8x1xi32, #tpu.memory_space<vmem>>, vector<8x1xi32>
    %1 = tpu.iota {dimensions = array<i32: 1>} : vector<8x64xi32>
    %2 = vector.broadcast %0 : vector<8x1xi32> to vector<8x64xi32>
    %3 = arith.cmpi eq, %1, %2 : vector<8x64xi32>
    %4 = arith.extui %3 : vector<8x64xi1> to vector<8x64xi32>
    %5 = arith.sitofp %4 : vector<8x64xi32> to vector<8x64xf32>
    %c0_1 = arith.constant 0 : index
    %c0_2 = arith.constant 0 : index
    %6 = vector.load %arg2[%c0_1, %c0_2] : memref<64x32xf32, #tpu.memory_space<vmem>>, vector<64x32xf32>
    %cst = arith.constant dense<0.000000e+00> : vector<8x32xf32>
    %7 = tpu.matmul %5, %6, %cst {dimension_numbers = #tpu.dot_dimension_numbers<[1], [0], [0], [1], [0, 0, 1, 1], [], []>} : vector<8x64xf32>, vector<64x32xf32>, vector<8x32xf32> -> vector<8x32xf32>
    %cst_3 = arith.constant 0.000000e+00 : f32
    %8 = vector.broadcast %cst_3 : f32 to vector<8x32xf32>
    %9 = arith.maximumf %7, %8 : vector<8x32xf32>
    %c0_4 = arith.constant 0 : index
    %c0_5 = arith.constant 0 : index
    %10 = vector.load %arg4[%c0_4, %c0_5] : memref<32x384xf32, #tpu.memory_space<vmem>>, vector<32x384xf32>
    %cst_6 = arith.constant dense<0.000000e+00> : vector<8x384xf32>
    %11 = tpu.matmul %9, %10, %cst_6 {dimension_numbers = #tpu.dot_dimension_numbers<[1], [0], [0], [1], [0, 0, 1, 1], [], []>} : vector<8x32xf32>, vector<32x384xf32>, vector<8x384xf32> -> vector<8x384xf32>
    %c0_7 = arith.constant 0 : index
    %c0_8 = arith.constant 0 : index
    %12 = vector.load %arg7[%c0_7, %c0_8] : memref<8x384xf32, #tpu.memory_space<vmem>>, vector<1x384xf32>
    %13 = vector.broadcast %12 : vector<1x384xf32> to vector<8x384xf32>
    %14 = arith.addf %11, %13 : vector<8x384xf32>
    %c0_9 = arith.constant 0 : index
    %c0_10 = arith.constant 0 : index
    %15 = vector.load %arg10[%c0_9, %c0_10] : memref<8x384xf32, #tpu.memory_space<vmem>>, vector<8x384xf32>
    tpu.vector_store %arg10[%c0_9, %c0_10], %14 {strides = array<i32>} : memref<8x384xf32, #tpu.memory_space<vmem>>, vector<8x384xf32>,
    %c0_11 = arith.constant 0 : index
    %c0_12 = arith.constant 0 : index
    %16 = vector.load %arg5[%c0_11, %c0_12] : memref<128x384xf32, #tpu.memory_space<vmem>>, vector<128x384xf32>
    %c1 = arith.constant 1 : index
    %c0_13 = arith.constant 0 : index
    %17 = vector.load %arg7[%c1, %c0_13] : memref<8x384xf32, #tpu.memory_space<vmem>>, vector<1x128xf32>
    %c0_14 = arith.constant 0 : index
    %c0_15 = arith.constant 0 : index
    %18 = vector.load %arg3[%c0_14, %c0_15] : memref<1x128xf32, #tpu.memory_space<vmem>>, vector<1x128xf32>
    %c0_16 = arith.constant 0 : index
    %c0_17 = arith.constant 0 : index
    %19 = vector.load %arg10[%c0_16, %c0_17] : memref<8x384xf32, #tpu.memory_space<vmem>>, vector<1x384xf32>
    %cst_18 = arith.constant dense<0.000000e+00> : vector<1x384xf32>
    %20 = tpu.matmul %18, %16, %cst_18 {dimension_numbers = #tpu.dot_dimension_numbers<[1], [0], [0], [1], [0, 0, 1, 1], [], []>} : vector<1x128xf32>, vector<128x384xf32>, vector<1x384xf32> -> vector<1x384xf32>
    %21 = vector.extract_strided_slice %19 {offsets = [0, 0], sizes = [1, 128], strides = [1, 1]} : vector<1x384xf32> to vector<1x128xf32>
    %22 = vector.extract_strided_slice %20 {offsets = [0, 0], sizes = [1, 128], strides = [1, 1]} : vector<1x384xf32> to vector<1x128xf32>
    %23 = arith.addf %21, %22 : vector<1x128xf32>
    %24 = arith.negf %23 : vector<1x128xf32>
    %25 = math.exp %24 : vector<1x128xf32>
    %cst_19 = arith.constant 1.000000e+00 : f32
    %26 = vector.broadcast %cst_19 : f32 to vector<1x128xf32>
    %27 = arith.addf %26, %25 : vector<1x128xf32>
    %28 = arith.divf %26, %27 : vector<1x128xf32>
    %29 = vector.extract_strided_slice %19 {offsets = [0, 128], sizes = [1, 128], strides = [1, 1]} : vector<1x384xf32> to vector<1x128xf32>
    %30 = vector.extract_strided_slice %20 {offsets = [0, 128], sizes = [1, 128], strides = [1, 1]} : vector<1x384xf32> to vector<1x128xf32>
    %31 = arith.addf %29, %30 : vector<1x128xf32>
    %32 = arith.negf %31 : vector<1x128xf32>
    %33 = math.exp %32 : vector<1x128xf32>
    %cst_20 = arith.constant 1.000000e+00 : f32
    %34 = vector.broadcast %cst_20 : f32 to vector<1x128xf32>
    %35 = arith.addf %34, %33 : vector<1x128xf32>
    %36 = arith.divf %34, %35 : vector<1x128xf32>
    %37 = vector.extract_strided_slice %19 {offsets = [0, 256], sizes = [1, 128], strides = [1, 1]} : vector<1x384xf32> to vector<1x128xf32>
    %38 = vector.extract_strided_slice %20 {offsets = [0, 256], sizes = [1, 128], strides = [1, 1]} : vector<1x384xf32> to vector<1x128xf32>
    %39 = arith.addf %38, %17 : vector<1x128xf32>
    %40 = arith.mulf %28, %39 : vector<1x128xf32>
    %41 = arith.addf %37, %40 : vector<1x128xf32>
    %42 = math.tanh %41 : vector<1x128xf32>
    %cst_21 = arith.constant 1.000000e+00 : f32
    %43 = vector.broadcast %cst_21 : f32 to vector<1x128xf32>
    %44 = arith.subf %43, %36 : vector<1x128xf32>
    %45 = arith.mulf %44, %42 : vector<1x128xf32>
    %46 = arith.mulf %36, %18 : vector<1x128xf32>
    %47 = arith.addf %45, %46 : vector<1x128xf32>
    %c0_22 = arith.constant 0 : index
    %c0_23 = arith.constant 0 : index
    %48 = vector.load %arg11[%c0_22, %c0_23] : memref<8x128xf32, #tpu.memory_space<vmem>>, vector<1x128xf32>
    tpu.vector_store %arg11[%c0_22, %c0_23], %47 {strides = array<i32>} : memref<8x128xf32, #tpu.memory_space<vmem>>, vector<1x128xf32>,
    %c1_24 = arith.constant 1 : index
    %c0_25 = arith.constant 0 : index
    %49 = vector.load %arg10[%c1_24, %c0_25] : memref<8x384xf32, #tpu.memory_space<vmem>>, vector<1x384xf32>
    %cst_26 = arith.constant dense<0.000000e+00> : vector<1x384xf32>
    %50 = tpu.matmul %47, %16, %cst_26 {dimension_numbers = #tpu.dot_dimension_numbers<[1], [0], [0], [1], [0, 0, 1, 1], [], []>} : vector<1x128xf32>, vector<128x384xf32>, vector<1x384xf32> -> vector<1x384xf32>
    %51 = vector.extract_strided_slice %49 {offsets = [0, 0], sizes = [1, 128], strides = [1, 1]} : vector<1x384xf32> to vector<1x128xf32>
    %52 = vector.extract_strided_slice %50 {offsets = [0, 0], sizes = [1, 128], strides = [1, 1]} : vector<1x384xf32> to vector<1x128xf32>
    %53 = arith.addf %51, %52 : vector<1x128xf32>
    %54 = arith.negf %53 : vector<1x128xf32>
    %55 = math.exp %54 : vector<1x128xf32>
    %cst_27 = arith.constant 1.000000e+00 : f32
    %56 = vector.broadcast %cst_27 : f32 to vector<1x128xf32>
    %57 = arith.addf %56, %55 : vector<1x128xf32>
    %58 = arith.divf %56, %57 : vector<1x128xf32>
    %59 = vector.extract_strided_slice %49 {offsets = [0, 128], sizes = [1, 128], strides = [1, 1]} : vector<1x384xf32> to vector<1x128xf32>
    %60 = vector.extract_strided_slice %50 {offsets = [0, 128], sizes = [1, 128], strides = [1, 1]} : vector<1x384xf32> to vector<1x128xf32>
    %61 = arith.addf %59, %60 : vector<1x128xf32>
    %62 = arith.negf %61 : vector<1x128xf32>
    %63 = math.exp %62 : vector<1x128xf32>
    %cst_28 = arith.constant 1.000000e+00 : f32
    %64 = vector.broadcast %cst_28 : f32 to vector<1x128xf32>
    %65 = arith.addf %64, %63 : vector<1x128xf32>
    %66 = arith.divf %64, %65 : vector<1x128xf32>
    %67 = vector.extract_strided_slice %49 {offsets = [0, 256], sizes = [1, 128], strides = [1, 1]} : vector<1x384xf32> to vector<1x128xf32>
    %68 = vector.extract_strided_slice %50 {offsets = [0, 256], sizes = [1, 128], strides = [1, 1]} : vector<1x384xf32> to vector<1x128xf32>
    %69 = arith.addf %68, %17 : vector<1x128xf32>
    %70 = arith.mulf %58, %69 : vector<1x128xf32>
    %71 = arith.addf %67, %70 : vector<1x128xf32>
    %72 = math.tanh %71 : vector<1x128xf32>
    %cst_29 = arith.constant 1.000000e+00 : f32
    %73 = vector.broadcast %cst_29 : f32 to vector<1x128xf32>
    %74 = arith.subf %73, %66 : vector<1x128xf32>
    %75 = arith.mulf %74, %72 : vector<1x128xf32>
    %76 = arith.mulf %66, %47 : vector<1x128xf32>
    %77 = arith.addf %75, %76 : vector<1x128xf32>
    %c1_30 = arith.constant 1 : index
    %c0_31 = arith.constant 0 : index
    %78 = vector.load %arg11[%c1_30, %c0_31] : memref<8x128xf32, #tpu.memory_space<vmem>>, vector<1x128xf32>
    tpu.vector_store %arg11[%c1_30, %c0_31], %77 {strides = array<i32>} : memref<8x128xf32, #tpu.memory_space<vmem>>, vector<1x128xf32>,
    %c2 = arith.constant 2 : index
    %c0_32 = arith.constant 0 : index
    %79 = vector.load %arg10[%c2, %c0_32] : memref<8x384xf32, #tpu.memory_space<vmem>>, vector<1x384xf32>
    %cst_33 = arith.constant dense<0.000000e+00> : vector<1x384xf32>
    %80 = tpu.matmul %77, %16, %cst_33 {dimension_numbers = #tpu.dot_dimension_numbers<[1], [0], [0], [1], [0, 0, 1, 1], [], []>} : vector<1x128xf32>, vector<128x384xf32>, vector<1x384xf32> -> vector<1x384xf32>
    %81 = vector.extract_strided_slice %79 {offsets = [0, 0], sizes = [1, 128], strides = [1, 1]} : vector<1x384xf32> to vector<1x128xf32>
    %82 = vector.extract_strided_slice %80 {offsets = [0, 0], sizes = [1, 128], strides = [1, 1]} : vector<1x384xf32> to vector<1x128xf32>
    %83 = arith.addf %81, %82 : vector<1x128xf32>
    %84 = arith.negf %83 : vector<1x128xf32>
    %85 = math.exp %84 : vector<1x128xf32>
    %cst_34 = arith.constant 1.000000e+00 : f32
    %86 = vector.broadcast %cst_34 : f32 to vector<1x128xf32>
    %87 = arith.addf %86, %85 : vector<1x128xf32>
    %88 = arith.divf %86, %87 : vector<1x128xf32>
    %89 = vector.extract_strided_slice %79 {offsets = [0, 128], sizes = [1, 128], strides = [1, 1]} : vector<1x384xf32> to vector<1x128xf32>
    %90 = vector.extract_strided_slice %80 {offsets = [0, 128], sizes = [1, 128], strides = [1, 1]} : vector<1x384xf32> to vector<1x128xf32>
    %91 = arith.addf %89, %90 : vector<1x128xf32>
    %92 = arith.negf %91 : vector<1x128xf32>
    %93 = math.exp %92 : vector<1x128xf32>
    %cst_35 = arith.constant 1.000000e+00 : f32
    %94 = vector.broadcast %cst_35 : f32 to vector<1x128xf32>
    %95 = arith.addf %94, %93 : vector<1x128xf32>
    %96 = arith.divf %94, %95 : vector<1x128xf32>
    %97 = vector.extract_strided_slice %79 {offsets = [0, 256], sizes = [1, 128], strides = [1, 1]} : vector<1x384xf32> to vector<1x128xf32>
    %98 = vector.extract_strided_slice %80 {offsets = [0, 256], sizes = [1, 128], strides = [1, 1]} : vector<1x384xf32> to vector<1x128xf32>
    %99 = arith.addf %98, %17 : vector<1x128xf32>
    %100 = arith.mulf %88, %99 : vector<1x128xf32>
    %101 = arith.addf %97, %100 : vector<1x128xf32>
    %102 = math.tanh %101 : vector<1x128xf32>
    %cst_36 = arith.constant 1.000000e+00 : f32
    %103 = vector.broadcast %cst_36 : f32 to vector<1x128xf32>
    %104 = arith.subf %103, %96 : vector<1x128xf32>
    %105 = arith.mulf %104, %102 : vector<1x128xf32>
    %106 = arith.mulf %96, %77 : vector<1x128xf32>
    %107 = arith.addf %105, %106 : vector<1x128xf32>
    %c2_37 = arith.constant 2 : index
    %c0_38 = arith.constant 0 : index
    %108 = vector.load %arg11[%c2_37, %c0_38] : memref<8x128xf32, #tpu.memory_space<vmem>>, vector<1x128xf32>
    tpu.vector_store %arg11[%c2_37, %c0_38], %107 {strides = array<i32>} : memref<8x128xf32, #tpu.memory_space<vmem>>, vector<1x128xf32>,
    %c3 = arith.constant 3 : index
    %c0_39 = arith.constant 0 : index
    %109 = vector.load %arg10[%c3, %c0_39] : memref<8x384xf32, #tpu.memory_space<vmem>>, vector<1x384xf32>
    %cst_40 = arith.constant dense<0.000000e+00> : vector<1x384xf32>
    %110 = tpu.matmul %107, %16, %cst_40 {dimension_numbers = #tpu.dot_dimension_numbers<[1], [0], [0], [1], [0, 0, 1, 1], [], []>} : vector<1x128xf32>, vector<128x384xf32>, vector<1x384xf32> -> vector<1x384xf32>
    %111 = vector.extract_strided_slice %109 {offsets = [0, 0], sizes = [1, 128], strides = [1, 1]} : vector<1x384xf32> to vector<1x128xf32>
    %112 = vector.extract_strided_slice %110 {offsets = [0, 0], sizes = [1, 128], strides = [1, 1]} : vector<1x384xf32> to vector<1x128xf32>
    %113 = arith.addf %111, %112 : vector<1x128xf32>
    %114 = arith.negf %113 : vector<1x128xf32>
    %115 = math.exp %114 : vector<1x128xf32>
    %cst_41 = arith.constant 1.000000e+00 : f32
    %116 = vector.broadcast %cst_41 : f32 to vector<1x128xf32>
    %117 = arith.addf %116, %115 : vector<1x128xf32>
    %118 = arith.divf %116, %117 : vector<1x128xf32>
    %119 = vector.extract_strided_slice %109 {offsets = [0, 128], sizes = [1, 128], strides = [1, 1]} : vector<1x384xf32> to vector<1x128xf32>
    %120 = vector.extract_strided_slice %110 {offsets = [0, 128], sizes = [1, 128], strides = [1, 1]} : vector<1x384xf32> to vector<1x128xf32>
    %121 = arith.addf %119, %120 : vector<1x128xf32>
    %122 = arith.negf %121 : vector<1x128xf32>
    %123 = math.exp %122 : vector<1x128xf32>
    %cst_42 = arith.constant 1.000000e+00 : f32
    %124 = vector.broadcast %cst_42 : f32 to vector<1x128xf32>
    %125 = arith.addf %124, %123 : vector<1x128xf32>
    %126 = arith.divf %124, %125 : vector<1x128xf32>
    %127 = vector.extract_strided_slice %109 {offsets = [0, 256], sizes = [1, 128], strides = [1, 1]} : vector<1x384xf32> to vector<1x128xf32>
    %128 = vector.extract_strided_slice %110 {offsets = [0, 256], sizes = [1, 128], strides = [1, 1]} : vector<1x384xf32> to vector<1x128xf32>
    %129 = arith.addf %128, %17 : vector<1x128xf32>
    %130 = arith.mulf %118, %129 : vector<1x128xf32>
    %131 = arith.addf %127, %130 : vector<1x128xf32>
    %132 = math.tanh %131 : vector<1x128xf32>
    %cst_43 = arith.constant 1.000000e+00 : f32
    %133 = vector.broadcast %cst_43 : f32 to vector<1x128xf32>
    %134 = arith.subf %133, %126 : vector<1x128xf32>
    %135 = arith.mulf %134, %132 : vector<1x128xf32>
    %136 = arith.mulf %126, %107 : vector<1x128xf32>
    %137 = arith.addf %135, %136 : vector<1x128xf32>
    %c3_44 = arith.constant 3 : index
    %c0_45 = arith.constant 0 : index
    %138 = vector.load %arg11[%c3_44, %c0_45] : memref<8x128xf32, #tpu.memory_space<vmem>>, vector<1x128xf32>
    tpu.vector_store %arg11[%c3_44, %c0_45], %137 {strides = array<i32>} : memref<8x128xf32, #tpu.memory_space<vmem>>, vector<1x128xf32>,
    %c4 = arith.constant 4 : index
    %c0_46 = arith.constant 0 : index
    %139 = vector.load %arg10[%c4, %c0_46] : memref<8x384xf32, #tpu.memory_space<vmem>>, vector<1x384xf32>
    %cst_47 = arith.constant dense<0.000000e+00> : vector<1x384xf32>
    %140 = tpu.matmul %137, %16, %cst_47 {dimension_numbers = #tpu.dot_dimension_numbers<[1], [0], [0], [1], [0, 0, 1, 1], [], []>} : vector<1x128xf32>, vector<128x384xf32>, vector<1x384xf32> -> vector<1x384xf32>
    %141 = vector.extract_strided_slice %139 {offsets = [0, 0], sizes = [1, 128], strides = [1, 1]} : vector<1x384xf32> to vector<1x128xf32>
    %142 = vector.extract_strided_slice %140 {offsets = [0, 0], sizes = [1, 128], strides = [1, 1]} : vector<1x384xf32> to vector<1x128xf32>
    %143 = arith.addf %141, %142 : vector<1x128xf32>
    %144 = arith.negf %143 : vector<1x128xf32>
    %145 = math.exp %144 : vector<1x128xf32>
    %cst_48 = arith.constant 1.000000e+00 : f32
    %146 = vector.broadcast %cst_48 : f32 to vector<1x128xf32>
    %147 = arith.addf %146, %145 : vector<1x128xf32>
    %148 = arith.divf %146, %147 : vector<1x128xf32>
    %149 = vector.extract_strided_slice %139 {offsets = [0, 128], sizes = [1, 128], strides = [1, 1]} : vector<1x384xf32> to vector<1x128xf32>
    %150 = vector.extract_strided_slice %140 {offsets = [0, 128], sizes = [1, 128], strides = [1, 1]} : vector<1x384xf32> to vector<1x128xf32>
    %151 = arith.addf %149, %150 : vector<1x128xf32>
    %152 = arith.negf %151 : vector<1x128xf32>
    %153 = math.exp %152 : vector<1x128xf32>
    %cst_49 = arith.constant 1.000000e+00 : f32
    %154 = vector.broadcast %cst_49 : f32 to vector<1x128xf32>
    %155 = arith.addf %154, %153 : vector<1x128xf32>
    %156 = arith.divf %154, %155 : vector<1x128xf32>
    %157 = vector.extract_strided_slice %139 {offsets = [0, 256], sizes = [1, 128], strides = [1, 1]} : vector<1x384xf32> to vector<1x128xf32>
    %158 = vector.extract_strided_slice %140 {offsets = [0, 256], sizes = [1, 128], strides = [1, 1]} : vector<1x384xf32> to vector<1x128xf32>
    %159 = arith.addf %158, %17 : vector<1x128xf32>
    %160 = arith.mulf %148, %159 : vector<1x128xf32>
    %161 = arith.addf %157, %160 : vector<1x128xf32>
    %162 = math.tanh %161 : vector<1x128xf32>
    %cst_50 = arith.constant 1.000000e+00 : f32
    %163 = vector.broadcast %cst_50 : f32 to vector<1x128xf32>
    %164 = arith.subf %163, %156 : vector<1x128xf32>
    %165 = arith.mulf %164, %162 : vector<1x128xf32>
    %166 = arith.mulf %156, %137 : vector<1x128xf32>
    %167 = arith.addf %165, %166 : vector<1x128xf32>
    %c4_51 = arith.constant 4 : index
    %c0_52 = arith.constant 0 : index
    %168 = vector.load %arg11[%c4_51, %c0_52] : memref<8x128xf32, #tpu.memory_space<vmem>>, vector<1x128xf32>
    tpu.vector_store %arg11[%c4_51, %c0_52], %167 {strides = array<i32>} : memref<8x128xf32, #tpu.memory_space<vmem>>, vector<1x128xf32>,
    %c5 = arith.constant 5 : index
    %c0_53 = arith.constant 0 : index
    %169 = vector.load %arg10[%c5, %c0_53] : memref<8x384xf32, #tpu.memory_space<vmem>>, vector<1x384xf32>
    %cst_54 = arith.constant dense<0.000000e+00> : vector<1x384xf32>
    %170 = tpu.matmul %167, %16, %cst_54 {dimension_numbers = #tpu.dot_dimension_numbers<[1], [0], [0], [1], [0, 0, 1, 1], [], []>} : vector<1x128xf32>, vector<128x384xf32>, vector<1x384xf32> -> vector<1x384xf32>
    %171 = vector.extract_strided_slice %169 {offsets = [0, 0], sizes = [1, 128], strides = [1, 1]} : vector<1x384xf32> to vector<1x128xf32>
    %172 = vector.extract_strided_slice %170 {offsets = [0, 0], sizes = [1, 128], strides = [1, 1]} : vector<1x384xf32> to vector<1x128xf32>
    %173 = arith.addf %171, %172 : vector<1x128xf32>
    %174 = arith.negf %173 : vector<1x128xf32>
    %175 = math.exp %174 : vector<1x128xf32>
    %cst_55 = arith.constant 1.000000e+00 : f32
    %176 = vector.broadcast %cst_55 : f32 to vector<1x128xf32>
    %177 = arith.addf %176, %175 : vector<1x128xf32>
    %178 = arith.divf %176, %177 : vector<1x128xf32>
    %179 = vector.extract_strided_slice %169 {offsets = [0, 128], sizes = [1, 128], strides = [1, 1]} : vector<1x384xf32> to vector<1x128xf32>
    %180 = vector.extract_strided_slice %170 {offsets = [0, 128], sizes = [1, 128], strides = [1, 1]} : vector<1x384xf32> to vector<1x128xf32>
    %181 = arith.addf %179, %180 : vector<1x128xf32>
    %182 = arith.negf %181 : vector<1x128xf32>
    %183 = math.exp %182 : vector<1x128xf32>
    %cst_56 = arith.constant 1.000000e+00 : f32
    %184 = vector.broadcast %cst_56 : f32 to vector<1x128xf32>
    %185 = arith.addf %184, %183 : vector<1x128xf32>
    %186 = arith.divf %184, %185 : vector<1x128xf32>
    %187 = vector.extract_strided_slice %169 {offsets = [0, 256], sizes = [1, 128], strides = [1, 1]} : vector<1x384xf32> to vector<1x128xf32>
    %188 = vector.extract_strided_slice %170 {offsets = [0, 256], sizes = [1, 128], strides = [1, 1]} : vector<1x384xf32> to vector<1x128xf32>
    %189 = arith.addf %188, %17 : vector<1x128xf32>
    %190 = arith.mulf %178, %189 : vector<1x128xf32>
    %191 = arith.addf %187, %190 : vector<1x128xf32>
    %192 = math.tanh %191 : vector<1x128xf32>
    %cst_57 = arith.constant 1.000000e+00 : f32
    %193 = vector.broadcast %cst_57 : f32 to vector<1x128xf32>
    %194 = arith.subf %193, %186 : vector<1x128xf32>
    %195 = arith.mulf %194, %192 : vector<1x128xf32>
    %196 = arith.mulf %186, %167 : vector<1x128xf32>
    %197 = arith.addf %195, %196 : vector<1x128xf32>
    %c5_58 = arith.constant 5 : index
    %c0_59 = arith.constant 0 : index
    %198 = vector.load %arg11[%c5_58, %c0_59] : memref<8x128xf32, #tpu.memory_space<vmem>>, vector<1x128xf32>
    tpu.vector_store %arg11[%c5_58, %c0_59], %197 {strides = array<i32>} : memref<8x128xf32, #tpu.memory_space<vmem>>, vector<1x128xf32>,
    %c6 = arith.constant 6 : index
    %c0_60 = arith.constant 0 : index
    %199 = vector.load %arg10[%c6, %c0_60] : memref<8x384xf32, #tpu.memory_space<vmem>>, vector<1x384xf32>
    %cst_61 = arith.constant dense<0.000000e+00> : vector<1x384xf32>
    %200 = tpu.matmul %197, %16, %cst_61 {dimension_numbers = #tpu.dot_dimension_numbers<[1], [0], [0], [1], [0, 0, 1, 1], [], []>} : vector<1x128xf32>, vector<128x384xf32>, vector<1x384xf32> -> vector<1x384xf32>
    %201 = vector.extract_strided_slice %199 {offsets = [0, 0], sizes = [1, 128], strides = [1, 1]} : vector<1x384xf32> to vector<1x128xf32>
    %202 = vector.extract_strided_slice %200 {offsets = [0, 0], sizes = [1, 128], strides = [1, 1]} : vector<1x384xf32> to vector<1x128xf32>
    %203 = arith.addf %201, %202 : vector<1x128xf32>
    %204 = arith.negf %203 : vector<1x128xf32>
    %205 = math.exp %204 : vector<1x128xf32>
    %cst_62 = arith.constant 1.000000e+00 : f32
    %206 = vector.broadcast %cst_62 : f32 to vector<1x128xf32>
    %207 = arith.addf %206, %205 : vector<1x128xf32>
    %208 = arith.divf %206, %207 : vector<1x128xf32>
    %209 = vector.extract_strided_slice %199 {offsets = [0, 128], sizes = [1, 128], strides = [1, 1]} : vector<1x384xf32> to vector<1x128xf32>
    %210 = vector.extract_strided_slice %200 {offsets = [0, 128], sizes = [1, 128], strides = [1, 1]} : vector<1x384xf32> to vector<1x128xf32>
    %211 = arith.addf %209, %210 : vector<1x128xf32>
    %212 = arith.negf %211 : vector<1x128xf32>
    %213 = math.exp %212 : vector<1x128xf32>
    %cst_63 = arith.constant 1.000000e+00 : f32
    %214 = vector.broadcast %cst_63 : f32 to vector<1x128xf32>
    %215 = arith.addf %214, %213 : vector<1x128xf32>
    %216 = arith.divf %214, %215 : vector<1x128xf32>
    %217 = vector.extract_strided_slice %199 {offsets = [0, 256], sizes = [1, 128], strides = [1, 1]} : vector<1x384xf32> to vector<1x128xf32>
    %218 = vector.extract_strided_slice %200 {offsets = [0, 256], sizes = [1, 128], strides = [1, 1]} : vector<1x384xf32> to vector<1x128xf32>
    %219 = arith.addf %218, %17 : vector<1x128xf32>
    %220 = arith.mulf %208, %219 : vector<1x128xf32>
    %221 = arith.addf %217, %220 : vector<1x128xf32>
    %222 = math.tanh %221 : vector<1x128xf32>
    %cst_64 = arith.constant 1.000000e+00 : f32
    %223 = vector.broadcast %cst_64 : f32 to vector<1x128xf32>
    %224 = arith.subf %223, %216 : vector<1x128xf32>
    %225 = arith.mulf %224, %222 : vector<1x128xf32>
    %226 = arith.mulf %216, %197 : vector<1x128xf32>
    %227 = arith.addf %225, %226 : vector<1x128xf32>
    %c6_65 = arith.constant 6 : index
    %c0_66 = arith.constant 0 : index
    %228 = vector.load %arg11[%c6_65, %c0_66] : memref<8x128xf32, #tpu.memory_space<vmem>>, vector<1x128xf32>
    tpu.vector_store %arg11[%c6_65, %c0_66], %227 {strides = array<i32>} : memref<8x128xf32, #tpu.memory_space<vmem>>, vector<1x128xf32>,
    %c7 = arith.constant 7 : index
    %c0_67 = arith.constant 0 : index
    %229 = vector.load %arg10[%c7, %c0_67] : memref<8x384xf32, #tpu.memory_space<vmem>>, vector<1x384xf32>
    %cst_68 = arith.constant dense<0.000000e+00> : vector<1x384xf32>
    %230 = tpu.matmul %227, %16, %cst_68 {dimension_numbers = #tpu.dot_dimension_numbers<[1], [0], [0], [1], [0, 0, 1, 1], [], []>} : vector<1x128xf32>, vector<128x384xf32>, vector<1x384xf32> -> vector<1x384xf32>
    %231 = vector.extract_strided_slice %229 {offsets = [0, 0], sizes = [1, 128], strides = [1, 1]} : vector<1x384xf32> to vector<1x128xf32>
    %232 = vector.extract_strided_slice %230 {offsets = [0, 0], sizes = [1, 128], strides = [1, 1]} : vector<1x384xf32> to vector<1x128xf32>
    %233 = arith.addf %231, %232 : vector<1x128xf32>
    %234 = arith.negf %233 : vector<1x128xf32>
    %235 = math.exp %234 : vector<1x128xf32>
    %cst_69 = arith.constant 1.000000e+00 : f32
    %236 = vector.broadcast %cst_69 : f32 to vector<1x128xf32>
    %237 = arith.addf %236, %235 : vector<1x128xf32>
    %238 = arith.divf %236, %237 : vector<1x128xf32>
    %239 = vector.extract_strided_slice %229 {offsets = [0, 128], sizes = [1, 128], strides = [1, 1]} : vector<1x384xf32> to vector<1x128xf32>
    %240 = vector.extract_strided_slice %230 {offsets = [0, 128], sizes = [1, 128], strides = [1, 1]} : vector<1x384xf32> to vector<1x128xf32>
    %241 = arith.addf %239, %240 : vector<1x128xf32>
    %242 = arith.negf %241 : vector<1x128xf32>
    %243 = math.exp %242 : vector<1x128xf32>
    %cst_70 = arith.constant 1.000000e+00 : f32
    %244 = vector.broadcast %cst_70 : f32 to vector<1x128xf32>
    %245 = arith.addf %244, %243 : vector<1x128xf32>
    %246 = arith.divf %244, %245 : vector<1x128xf32>
    %247 = vector.extract_strided_slice %229 {offsets = [0, 256], sizes = [1, 128], strides = [1, 1]} : vector<1x384xf32> to vector<1x128xf32>
    %248 = vector.extract_strided_slice %230 {offsets = [0, 256], sizes = [1, 128], strides = [1, 1]} : vector<1x384xf32> to vector<1x128xf32>
    %249 = arith.addf %248, %17 : vector<1x128xf32>
    %250 = arith.mulf %238, %249 : vector<1x128xf32>
    %251 = arith.addf %247, %250 : vector<1x128xf32>
    %252 = math.tanh %251 : vector<1x128xf32>
    %cst_71 = arith.constant 1.000000e+00 : f32
    %253 = vector.broadcast %cst_71 : f32 to vector<1x128xf32>
    %254 = arith.subf %253, %246 : vector<1x128xf32>
    %255 = arith.mulf %254, %252 : vector<1x128xf32>
    %256 = arith.mulf %246, %227 : vector<1x128xf32>
    %257 = arith.addf %255, %256 : vector<1x128xf32>
    %c7_72 = arith.constant 7 : index
    %c0_73 = arith.constant 0 : index
    %258 = vector.load %arg11[%c7_72, %c0_73] : memref<8x128xf32, #tpu.memory_space<vmem>>, vector<1x128xf32>
    tpu.vector_store %arg11[%c7_72, %c0_73], %257 {strides = array<i32>} : memref<8x128xf32, #tpu.memory_space<vmem>>, vector<1x128xf32>,
    %c0_74 = arith.constant 0 : index
    %c0_75 = arith.constant 0 : index
    %259 = vector.load %arg9[%c0_74, %c0_75] : memref<1x128xf32, #tpu.memory_space<vmem>>, vector<1x128xf32>
    tpu.vector_store %arg9[%c0_74, %c0_75], %257 {strides = array<i32>} : memref<1x128xf32, #tpu.memory_space<vmem>>, vector<1x128xf32>,
    %c0_76 = arith.constant 0 : index
    %c0_77 = arith.constant 0 : index
    %260 = vector.load %arg11[%c0_76, %c0_77] : memref<8x128xf32, #tpu.memory_space<vmem>>, vector<8x128xf32>
    %c0_78 = arith.constant 0 : index
    %c0_79 = arith.constant 0 : index
    %261 = vector.load %arg6[%c0_78, %c0_79] : memref<128x128xf32, #tpu.memory_space<vmem>>, vector<128x128xf32>
    %cst_80 = arith.constant dense<0.000000e+00> : vector<8x128xf32>
    %262 = tpu.matmul %260, %261, %cst_80 {dimension_numbers = #tpu.dot_dimension_numbers<[1], [0], [0], [1], [0, 0, 1, 1], [], []>} : vector<8x128xf32>, vector<128x128xf32>, vector<8x128xf32> -> vector<8x128xf32>
    %c2_81 = arith.constant 2 : index
    %c0_82 = arith.constant 0 : index
    %263 = vector.load %arg7[%c2_81, %c0_82] : memref<8x384xf32, #tpu.memory_space<vmem>>, vector<1x128xf32>
    %264 = vector.broadcast %263 : vector<1x128xf32> to vector<8x128xf32>
    %265 = arith.addf %262, %264 : vector<8x128xf32>
    %cst_83 = arith.constant dense<0xFF800000> : vector<8xf32>
    %266 = vector.multi_reduction <maximumf>, %265, %cst_83 [1] : vector<8x128xf32> to vector<8xf32>
    %267 = vector.shape_cast %266 : vector<8xf32> to vector<8x1xf32>
    %268 = vector.broadcast %267 : vector<8x1xf32> to vector<8x128xf32>
    %269 = arith.subf %265, %268 : vector<8x128xf32>
    %270 = math.exp %269 : vector<8x128xf32>
    %cst_84 = arith.constant dense<0.000000e+00> : vector<8xf32>
    %271 = vector.multi_reduction <add>, %270, %cst_84 [1] : vector<8x128xf32> to vector<8xf32>
    %272 = vector.shape_cast %271 : vector<8xf32> to vector<8x1xf32>
    %273 = math.log %272 : vector<8x1xf32>
    %274 = arith.addf %273, %267 : vector<8x1xf32>
    %275 = vector.broadcast %274 : vector<8x1xf32> to vector<8x128xf32>
    %276 = arith.subf %265, %275 : vector<8x128xf32>
    %c0_85 = arith.constant 0 : index
    %c0_86 = arith.constant 0 : index
    %277 = vector.load %arg8[%c0_85, %c0_86] : memref<8x128xf32, #tpu.memory_space<vmem>>, vector<8x128xf32>
    tpu.vector_store %arg8[%c0_85, %c0_86], %276 {strides = array<i32>} : memref<8x128xf32, #tpu.memory_space<vmem>>, vector<8x128xf32>,
    return
  }
  func.func @transform_0(%arg0: i32) -> (i32, i32) {
    %c0_i32 = arith.constant 0 : i32
    %c0_i32_0 = arith.constant 0 : i32
    %c0_i32_1 = arith.constant 0 : i32
    return %c0_i32, %c0_i32_0 : i32, i32
  }
  func.func @transform_1(%arg0: i32) -> (i32, i32) {
    %c0_i32 = arith.constant 0 : i32
    %c0_i32_0 = arith.constant 0 : i32
    %c0_i32_1 = arith.constant 0 : i32
    return %c0_i32, %c0_i32_0 : i32, i32
  }
  func.func @transform_2(%arg0: i32) -> (i32, i32) {
    %c0_i32 = arith.constant 0 : i32
    %c0_i32_0 = arith.constant 0 : i32
    %c0_i32_1 = arith.constant 0 : i32
    return %c0_i32, %c0_i32_0 : i32, i32
  }
  func.func @transform_3(%arg0: i32) -> (i32, i32) {
    %c0_i32 = arith.constant 0 : i32
    %c0_i32_0 = arith.constant 0 : i32
    %c0_i32_1 = arith.constant 0 : i32
    return %c0_i32, %c0_i32_0 : i32, i32
  }
  func.func @transform_4(%arg0: i32) -> (i32, i32) {
    %c0_i32 = arith.constant 0 : i32
    %c0_i32_0 = arith.constant 0 : i32
    %c0_i32_1 = arith.constant 0 : i32
    return %c0_i32, %c0_i32_0 : i32, i32
  }
  func.func @transform_5(%arg0: i32) -> (i32, i32) {
    %c0_i32 = arith.constant 0 : i32
    %c0_i32_0 = arith.constant 0 : i32
    %c0_i32_1 = arith.constant 0 : i32
    return %c0_i32, %c0_i32_0 : i32, i32
  }
  func.func @transform_6(%arg0: i32) -> (i32, i32) {
    %c0_i32 = arith.constant 0 : i32
    %c0_i32_0 = arith.constant 0 : i32
    %c0_i32_1 = arith.constant 0 : i32
    return %c0_i32, %c0_i32_0 : i32, i32
  }
  func.func @transform_7(%arg0: i32) -> (i32, i32) {
    %c0_i32 = arith.constant 0 : i32
    %c0_i32_0 = arith.constant 0 : i32
    %c0_i32_1 = arith.constant 0 : i32
    return %c0_i32, %c0_i32_0 : i32, i32
  }
  func.func @transform_8(%arg0: i32) -> (i32, i32) {
    %c0_i32 = arith.constant 0 : i32
    %c0_i32_0 = arith.constant 0 : i32
    %c0_i32_1 = arith.constant 0 : i32
    return %c0_i32, %c0_i32_0 : i32, i32
  }
}

</mosaic_0001>

<llo_original>
// kernel: tpu_custom_call.1
$region0: #{tpu_custom_call.1}
  #allocation0 [shape = 'u32[]', space=smem, size = 0x4, offset = 0x4, fixed_abs, tag = 'smem constant byte address 0x4 - core index']
  #allocation1 [shape = 'u32[72,128]{1,0:T(1,128)}', space=vmem, size = 0x9000, scoped, tag = 'internal scratch']
  #allocation2 [shape = 'f32[8,384]{1,0:T(8,128)}', space=vmem, size = 0x3000, scoped, tag = 'scratch operand']
  #allocation3 [shape = 'f32[8,128]{1,0:T(8,128)}', space=vmem, size = 0x1000, scoped, tag = 'scratch operand']
  %s0 = inlined_call_operand.vmem [shape: s32[8,1], index: 0, kind: input, shape index: {}]
  %s1 = inlined_call_operand.vmem [shape: f32[64,32], index: 1, kind: input, shape index: {}]
  %s2 = inlined_call_operand.vmem [shape: f32[1,128], index: 2, kind: input, shape index: {}]
  %s3 = inlined_call_operand.vmem [shape: f32[32,384], index: 3, kind: input, shape index: {}]
  %s4 = inlined_call_operand.hbm [shape: f32[128,384], index: 4, kind: input, shape index: {}]
  %s5 = inlined_call_operand.hbm [shape: f32[128,128], index: 5, kind: input, shape index: {}]
  %s6 = inlined_call_operand.hbm [shape: f32[8,384], index: 6, kind: input, shape index: {}]
  %s7 = inlined_call_operand.hbm [shape: f32[8,128], index: 7, kind: output, shape index: {0}]
  %s8 = inlined_call_operand.hbm [shape: f32[1,128], index: 8, kind: output, shape index: {1}]
  %9 = xla_tuple %s7, %s8
  %s10 = sld [smem:[#allocation0]]
  $region58: #{tpu_custom_call.1} parent=0
    _
  %s12 = ssub.s32 1, %s10
  %s13 = scalar_select 0, %s12, %s10
  $region1: #{tpu_custom_call.1} parent=0
    #allocation4 [shape = 'u8[196608]{0}', space=vmem, size = 0x30000, scoped, tag = 'input window, operand 4, single buffered']
    #allocation5 [shape = 's32[1]{0}', space=sflag, size = 0x4, scoped, tag = 'scoped memory for tpu_custom_call.1']
    #allocation6 [shape = 's32[1]{0}', space=sflag, size = 0x4, scoped, tag = 'scoped memory for tpu_custom_call.1']
    #allocation7 [shape = 'u8[65536]{0}', space=vmem, size = 0x10000, scoped, tag = 'input window, operand 5, single buffered']
    #allocation8 [shape = 's32[1]{0}', space=sflag, size = 0x4, scoped, tag = 'scoped memory for tpu_custom_call.1']
    #allocation9 [shape = 'u8[12288]{0}', space=vmem, size = 0x3000, scoped, tag = 'input window, operand 6, single buffered']
    #allocation10 [shape = 'u8[4096]{0}', space=vmem, size = 0x1000, scoped, tag = 'output window, operand 0, single buffered']
    #allocation11 [shape = 'u8[512]{0}', space=vmem, size = 0x400, scoped, tag = 'output window, operand 1, single buffered']
    #allocation12 [shape = 's32[1]{0}', space=sflag, size = 0x4, scoped, tag = 'scoped memory for tpu_custom_call.1']
    %14 = vsyncpa [#allocation5], 0
    %15 = vsyncpa [#allocation8], 0
    %16 = vsyncpa [#allocation6], 0
    %17 = vsyncpa [#allocation12], 0
    // Predicated region
    $region2: #{tpu_custom_call.1} parent=1 // pred_check
      _
    $region3: #{tpu_custom_call.1} parent=1 // pred_check_branch
      %19 = sbr.rel (0) target = $region5
    $region4: #{tpu_custom_call.1} parent=1 // pred_region
      _
    $region5: #{tpu_custom_call.1} parent=1 // pred_fallthru
      _
    // Predicated region
    $region6: #{tpu_custom_call.1} parent=1 // pred_check
      _
    $region7: #{tpu_custom_call.1} parent=1 // pred_check_branch
      %21 = sbr.rel (0) target = $region9
    $region8: #{tpu_custom_call.1} parent=1 // pred_region
      _
    $region9: #{tpu_custom_call.1} parent=1 // pred_fallthru
      _
    // Predicated region
    $region10: #{tpu_custom_call.1} parent=1 // pred_check
      _
    $region11: #{tpu_custom_call.1} parent=1 // pred_check_branch
      %23 = sbr.rel (0) target = $region13
    $region12: #{tpu_custom_call.1} parent=1 // pred_region
      _
    $region13: #{tpu_custom_call.1} parent=1 // pred_fallthru
      _
    // Predicated region
    $region14: #{tpu_custom_call.1} parent=1 // pred_check
      _
    $region15: #{tpu_custom_call.1} parent=1 // pred_check_branch
      %25 = sbr.rel (0) target = $region17
    $region16: #{tpu_custom_call.1} parent=1 // pred_region
      _
    $region17: #{tpu_custom_call.1} parent=1 // pred_fallthru
      _
    // Predicated region
    $region18: #{tpu_custom_call.1} parent=1 // pred_check
      _
    $region19: #{tpu_custom_call.1} parent=1 // pred_check_branch
      %27 = sbr.rel (0) target = $region21
    $region20: #{tpu_custom_call.1} parent=1 // pred_region
      %29 = vsyncadd [#allocation5], 0
      %s30 = sshll.u32 %s4, 4
      %s31 = int_to_ptr.hbm [resolvable:$true] %s30
      %s32 = sshll.u32 [#allocation4], 4
      %s33 = int_to_ptr.vmem [resolvable:$true] %s32
      %38 = dma.hbm_to_vmem [thread:$0]  %s31, 6144, %s33, [#allocation5], 384, 384, 24
    $region21: #{tpu_custom_call.1} parent=1 // pred_fallthru
      _
    // Predicated region
    $region22: #{tpu_custom_call.1} parent=1 // pred_check
      _
    $region23: #{tpu_custom_call.1} parent=1 // pred_check_branch
      %40 = sbr.rel (0) target = $region25
    $region24: #{tpu_custom_call.1} parent=1 // pred_region
      %42 = vsyncadd [#allocation8], 0
      %s43 = sshll.u32 %s5, 4
      %s44 = int_to_ptr.hbm [resolvable:$true] %s43
      %s45 = sshll.u32 [#allocation7], 4
      %s46 = int_to_ptr.vmem [resolvable:$true] %s45
      %51 = dma.hbm_to_vmem [thread:$0]  %s44, 2048, %s46, [#allocation8], 128, 128, 8
    $region25: #{tpu_custom_call.1} parent=1 // pred_fallthru
      _
    // Predicated region
    $region26: #{tpu_custom_call.1} parent=1 // pred_check
      _
    $region27: #{tpu_custom_call.1} parent=1 // pred_check_branch
      %53 = sbr.rel (0) target = $region29
    $region28: #{tpu_custom_call.1} parent=1 // pred_region
      %55 = vsyncadd [#allocation8], 0
      %s57 = sshll.u32 %s6, 4
      %s58 = int_to_ptr.hbm [resolvable:$true] %s57
      %s59 = sshll.u32 [#allocation9], 4
      %s60 = int_to_ptr.vmem [resolvable:$true] %s59
      %62 = dma.hbm_to_vmem [thread:$0]  %s58, 384, %s60, [#allocation8]
    $region29: #{tpu_custom_call.1} parent=1 // pred_fallthru
      _
    // Predicated region
    $region30: #{tpu_custom_call.1} parent=1 // pred_check
      _
    $region31: #{tpu_custom_call.1} parent=1 // pred_check_branch
      %64 = sbr.rel (0) target = $region33
    $region32: #{tpu_custom_call.1} parent=1 // pred_region
      %66 = dma.done [#allocation5], 6144
    $region33: #{tpu_custom_call.1} parent=1 // pred_fallthru
      _
    // Predicated region
    $region34: #{tpu_custom_call.1} parent=1 // pred_check
      _
    $region35: #{tpu_custom_call.1} parent=1 // pred_check_branch
      %68 = sbr.rel (0) target = $region37
    $region36: #{tpu_custom_call.1} parent=1 // pred_region
      %70 = dma.done [#allocation8], 2048
    $region37: #{tpu_custom_call.1} parent=1 // pred_fallthru
      _
    // Predicated region
    $region38: #{tpu_custom_call.1} parent=1 // pred_check
      _
    $region39: #{tpu_custom_call.1} parent=1 // pred_check_branch
      %72 = sbr.rel (0) target = $region41
    $region40: #{tpu_custom_call.1} parent=1 // pred_region
      %74 = dma.done [#allocation8], 384
    $region41: #{tpu_custom_call.1} parent=1 // pred_fallthru
      _
    %v75 = vld [vmem:[%s0] sm:$0xff]
    %v76 = vlaneseq
    %v77 = vand.u32 %v76, 127
    %78 = vset.pattern.permute.xlu0 0
    %79 = vperm.xlu0 %78, %v75
    %v80 = vpop.permute.xlu0 %79
    %vm81 = vcmp.eq.s32.totalorder %v77, %v80
    %v82 = vsel %vm81, 1, 0
    %v83 = vcvt.s32.f32 %v82
    %v84 = vld [vmem:[%s1] sm:$0xff]
    %v85 = vld [vmem:[%s1 + $0x8] sm:$0xff]
    %v86 = vld [vmem:[%s1 + $0x10] sm:$0xff]
    %v87 = vld [vmem:[%s1 + $0x18] sm:$0xff]
    %v88 = vld [vmem:[%s1 + $0x20] sm:$0xff]
    %v89 = vld [vmem:[%s1 + $0x28] sm:$0xff]
    %v90 = vld [vmem:[%s1 + $0x30] sm:$0xff]
    %v91 = vld [vmem:[%s1 + $0x38] sm:$0xff]
    %vm92 = vcmask 523264
    %v94 = vsel %vm92, %v83, 0
    %96 = vmatpush.msra.mxu0 0.0
    %97 = vmatpush.msra.mxu0 0.0
    %98 = vmatpush.msra.mxu0 0.0
    %99 = vmatpush.msra.mxu0 0.0
    %100 = vmatpush.msra.mxu0 0.0
    %101 = vmatpush.msra.mxu0 0.0
    %102 = vmatpush.msra.mxu0 0.0
    %103 = vmatpush.msra.mxu0 0.0
    %104 = vmatpush.msra.mxu0 %v91
    %105 = vmatpush.msra.mxu0 %v90
    %106 = vmatpush.msra.mxu0 %v89
    %107 = vmatpush.msra.mxu0 %v88
    %108 = vmatpush.msra.mxu0 %v87
    %109 = vmatpush.msra.mxu0 %v86
    %110 = vmatpush.msra.mxu0 %v85
    %111 = vmatpush.msra.mxu0 %v84
    %112 = vmatmul.f32.gmra.mxu0 %v94
    %v113 = vpop.f32.mrf.mxu0
    %v114 = vadd.f32 0.0, %v113
    %115 = vdwg.mxu0
    %v116 = vmax.f32 %v114, 0.0
    %v117 = vld [vmem:[%s3] sm:$0xff]
    %v118 = vld [vmem:[%s3 + $0x8] sm:$0xff]
    %v119 = vld [vmem:[%s3 + $0x10] sm:$0xff]
    %v120 = vld [vmem:[%s3 + $0x18] sm:$0xff]
    %v121 = vld [vmem:[%s3 + $0x20] sm:$0xff]
    %v122 = vld [vmem:[%s3 + $0x28] sm:$0xff]
    %v123 = vld [vmem:[%s3 + $0x30] sm:$0xff]
    %v124 = vld [vmem:[%s3 + $0x38] sm:$0xff]
    %v125 = vld [vmem:[%s3 + $0x40] sm:$0xff]
    %v126 = vld [vmem:[%s3 + $0x48] sm:$0xff]
    %v127 = vld [vmem:[%s3 + $0x50] sm:$0xff]
    %v128 = vld [vmem:[%s3 + $0x58] sm:$0xff]
    %v129 = vld [vmem:[#allocation9] ss:$8 sm:$0x7]
    %v131 = vperm.slane %v129, 0
    %v132 = vperm.slane %v129, 1
    %v133 = vperm.slane %v129, 2
    %vm137 = vcmask 261120
    %v139 = vsel %vm137, %v116, 0
    %141 = vmatpush.msra.mxu0 0.0
    %142 = vmatpush.msra.mxu0 0.0
    %143 = vmatpush.msra.mxu0 0.0
    %144 = vmatpush.msra.mxu0 0.0
    %145 = vmatpush.msra.mxu0 0.0
    %146 = vmatpush.msra.mxu0 0.0
    %147 = vmatpush.msra.mxu0 0.0
    %148 = vmatpush.msra.mxu0 0.0
    %149 = vmatpush.msra.mxu0 0.0
    %150 = vmatpush.msra.mxu0 0.0
    %151 = vmatpush.msra.mxu0 0.0
    %152 = vmatpush.msra.mxu0 0.0
    %153 = vmatpush.msra.mxu0 %v126
    %154 = vmatpush.msra.mxu0 %v123
    %155 = vmatpush.msra.mxu0 %v120
    %156 = vmatpush.msra.mxu0 %v117
    %157 = vmatmul.f32.gmra.mxu0 %v139
    %v158 = vpop.f32.mrf.mxu0
    %v159 = vadd.f32 %v131, %v158
    %160 = vdwg.mxu0
    %161 = vmatpush.msra.mxu0 0.0
    %162 = vmatpush.msra.mxu0 0.0
    %163 = vmatpush.msra.mxu0 0.0
    %164 = vmatpush.msra.mxu0 0.0
    %165 = vmatpush.msra.mxu0 0.0
    %166 = vmatpush.msra.mxu0 0.0
    %167 = vmatpush.msra.mxu0 0.0
    %168 = vmatpush.msra.mxu0 0.0
    %169 = vmatpush.msra.mxu0 0.0
    %170 = vmatpush.msra.mxu0 0.0
    %171 = vmatpush.msra.mxu0 0.0
    %172 = vmatpush.msra.mxu0 0.0
    %173 = vmatpush.msra.mxu0 %v127
    %174 = vmatpush.msra.mxu0 %v124
    %175 = vmatpush.msra.mxu0 %v121
    %176 = vmatpush.msra.mxu0 %v118
    %177 = vmatmul.f32.gmra.mxu0 %v139
    %v178 = vpop.f32.mrf.mxu0
    %v179 = vadd.f32 %v132, %v178
    %180 = vdwg.mxu0
    %181 = vmatpush.msra.mxu0 0.0
    %182 = vmatpush.msra.mxu0 0.0
    %183 = vmatpush.msra.mxu0 0.0
    %184 = vmatpush.msra.mxu0 0.0
    %185 = vmatpush.msra.mxu0 0.0
    %186 = vmatpush.msra.mxu0 0.0
    %187 = vmatpush.msra.mxu0 0.0
    %188 = vmatpush.msra.mxu0 0.0
    %189 = vmatpush.msra.mxu0 0.0
    %190 = vmatpush.msra.mxu0 0.0
    %191 = vmatpush.msra.mxu0 0.0
    %192 = vmatpush.msra.mxu0 0.0
    %193 = vmatpush.msra.mxu0 %v128
    %194 = vmatpush.msra.mxu0 %v125
    %195 = vmatpush.msra.mxu0 %v122
    %196 = vmatpush.msra.mxu0 %v119
    %197 = vmatmul.f32.gmra.mxu0 %v139
    %v198 = vpop.f32.mrf.mxu0
    %v199 = vadd.f32 %v133, %v198
    %200 = vdwg.mxu0
    %201 = vst [vmem:[#allocation2] sm:$0xff] %v159
    %202 = vst [vmem:[#allocation2 + $0x8] sm:$0xff] %v179
    %203 = vst [vmem:[#allocation2 + $0x10] sm:$0xff] %v199
    %v204 = vld [vmem:[#allocation4] sm:$0xff]
    %v205 = vld [vmem:[#allocation4 + $0x8] sm:$0xff]
    %v206 = vld [vmem:[#allocation4 + $0x10] sm:$0xff]
    %v207 = vld [vmem:[#allocation4 + $0x18] sm:$0xff]
    %v208 = vld [vmem:[#allocation4 + $0x20] sm:$0xff]
    %v209 = vld [vmem:[#allocation4 + $0x28] sm:$0xff]
    %v210 = vld [vmem:[#allocation4 + $0x30] sm:$0xff]
    %v211 = vld [vmem:[#allocation4 + $0x38] sm:$0xff]
    %v212 = vld [vmem:[#allocation4 + $0x40] sm:$0xff]
    %v213 = vld [vmem:[#allocation4 + $0x48] sm:$0xff]
    %v214 = vld [vmem:[#allocation4 + $0x50] sm:$0xff]
    %v215 = vld [vmem:[#allocation4 + $0x58] sm:$0xff]
    %v216 = vld [vmem:[#allocation4 + $0x60] sm:$0xff]
    %v217 = vld [vmem:[#allocation4 + $0x68] sm:$0xff]
    %v218 = vld [vmem:[#allocation4 + $0x70] sm:$0xff]
    %v219 = vld [vmem:[#allocation4 + $0x78] sm:$0xff]
    %v220 = vld [vmem:[#allocation4 + $0x80] sm:$0xff]
    %v221 = vld [vmem:[#allocation4 + $0x88] sm:$0xff]
    %v222 = vld [vmem:[#allocation4 + $0x90] sm:$0xff]
    %v223 = vld [vmem:[#allocation4 + $0x98] sm:$0xff]
    %v224 = vld [vmem:[#allocation4 + $0xa0] sm:$0xff]
    %v225 = vld [vmem:[#allocation4 + $0xa8] sm:$0xff]
    %v226 = vld [vmem:[#allocation4 + $0xb0] sm:$0xff]
    %v227 = vld [vmem:[#allocation4 + $0xb8] sm:$0xff]
    %v228 = vld [vmem:[#allocation4 + $0xc0] sm:$0xff]
    %v229 = vld [vmem:[#allocation4 + $0xc8] sm:$0xff]
    %v230 = vld [vmem:[#allocation4 + $0xd0] sm:$0xff]
    %v231 = vld [vmem:[#allocation4 + $0xd8] sm:$0xff]
    %v232 = vld [vmem:[#allocation4 + $0xe0] sm:$0xff]
    %v233 = vld [vmem:[#allocation4 + $0xe8] sm:$0xff]
    %v234 = vld [vmem:[#allocation4 + $0xf0] sm:$0xff]
    %v235 = vld [vmem:[#allocation4 + $0xf8] sm:$0xff]
    %v236 = vld [vmem:[#allocation4 + $0x100] sm:$0xff]
    %v237 = vld [vmem:[#allocation4 + $0x108] sm:$0xff]
    %v238 = vld [vmem:[#allocation4 + $0x110] sm:$0xff]
    %v239 = vld [vmem:[#allocation4 + $0x118] sm:$0xff]
    %v240 = vld [vmem:[#allocation4 + $0x120] sm:$0xff]
    %v241 = vld [vmem:[#allocation4 + $0x128] sm:$0xff]
    %v242 = vld [vmem:[#allocation4 + $0x130] sm:$0xff]
    %v243 = vld [vmem:[#allocation4 + $0x138] sm:$0xff]
    %v244 = vld [vmem:[#allocation4 + $0x140] sm:$0xff]
    %v245 = vld [vmem:[#allocation4 + $0x148] sm:$0xff]
    %v246 = vld [vmem:[#allocation4 + $0x150] sm:$0xff]
    %v247 = vld [vmem:[#allocation4 + $0x158] sm:$0xff]
    %v248 = vld [vmem:[#allocation4 + $0x160] sm:$0xff]
    %v249 = vld [vmem:[#allocation4 + $0x168] sm:$0xff]
    %v250 = vld [vmem:[#allocation4 + $0x170] sm:$0xff]
    %v251 = vld [vmem:[#allocation4 + $0x178] sm:$0xff]
    %v252 = vld [vmem:[#allocation9 + $0x1] ss:$0 sm:$0xff]
    %v253 = vld [vmem:[%s2] sm:$0x1]
    %v254 = vld [vmem:[#allocation2] ss:$8 sm:$0x7]
    %255 = vmatpush.msra.mxu0 %v249
    %256 = vmatpush.msra.mxu0 %v246
    %257 = vmatpush.msra.mxu0 %v243
    %258 = vmatpush.msra.mxu0 %v240
    %259 = vmatpush.msra.mxu0 %v237
    %260 = vmatpush.msra.mxu0 %v234
    %261 = vmatpush.msra.mxu0 %v231
    %262 = vmatpush.msra.mxu0 %v228
    %263 = vmatpush.msra.mxu0 %v225
    %264 = vmatpush.msra.mxu0 %v222
    %265 = vmatpush.msra.mxu0 %v219
    %266 = vmatpush.msra.mxu0 %v216
    %267 = vmatpush.msra.mxu0 %v213
    %268 = vmatpush.msra.mxu0 %v210
    %269 = vmatpush.msra.mxu0 %v207
    %270 = vmatpush.msra.mxu0 %v204
    %271 = vmatmul.f32.gmra.mxu0 %v253
    %v272 = vpop.f32.mrf.mxu0
    %v273 = vadd.f32 0.0, %v272
    %274 = vdwg.mxu0
    %275 = vmatpush.msra.mxu0 %v250
    %276 = vmatpush.msra.mxu0 %v247
    %277 = vmatpush.msra.mxu0 %v244
    %278 = vmatpush.msra.mxu0 %v241
    %279 = vmatpush.msra.mxu0 %v238
    %280 = vmatpush.msra.mxu0 %v235
    %281 = vmatpush.msra.mxu0 %v232
    %282 = vmatpush.msra.mxu0 %v229
    %283 = vmatpush.msra.mxu0 %v226
    %284 = vmatpush.msra.mxu0 %v223
    %285 = vmatpush.msra.mxu0 %v220
    %286 = vmatpush.msra.mxu0 %v217
    %287 = vmatpush.msra.mxu0 %v214
    %288 = vmatpush.msra.mxu0 %v211
    %289 = vmatpush.msra.mxu0 %v208
    %290 = vmatpush.msra.mxu0 %v205
    %291 = vmatmul.f32.gmra.mxu0 %v253
    %v292 = vpop.f32.mrf.mxu0
    %v293 = vadd.f32 0.0, %v292
    %294 = vdwg.mxu0
    %295 = vmatpush.msra.mxu0 %v251
    %296 = vmatpush.msra.mxu0 %v248
    %297 = vmatpush.msra.mxu0 %v245
    %298 = vmatpush.msra.mxu0 %v242
    %299 = vmatpush.msra.mxu0 %v239
    %300 = vmatpush.msra.mxu0 %v236
    %301 = vmatpush.msra.mxu0 %v233
    %302 = vmatpush.msra.mxu0 %v230
    %303 = vmatpush.msra.mxu0 %v227
    %304 = vmatpush.msra.mxu0 %v224
    %305 = vmatpush.msra.mxu0 %v221
    %306 = vmatpush.msra.mxu0 %v218
    %307 = vmatpush.msra.mxu0 %v215
    %308 = vmatpush.msra.mxu0 %v212
    %309 = vmatpush.msra.mxu0 %v209
    %310 = vmatpush.msra.mxu0 %v206
    %311 = vmatmul.f32.gmra.mxu0 %v253
    %v312 = vpop.f32.mrf.mxu0
    %v313 = vadd.f32 0.0, %v312
    %314 = vdwg.mxu0
    %v315 = vadd.f32 %v254, %v273
    %v316 = vxor.u32 %v315, 2147483648
    %v317 = vmul.f32 %v316, 1.442695
    %v318 = vpow.pop %v317
    %v319 = vadd.f32 %v318, 1.0
    %v320 = vrcp.pop %v319
    %v321 = vmul.f32 %v319, %v320
    %v322 = vsub.f32 1.0, %v321
    %v323 = vmul.f32 %v320, %v322
    %v324 = vadd.f32 %v320, %v323
    %vm325 = vweird.f32 %v319
    %vm326 = vweird.f32 %v320
    %vm327 = vmor %vm325, %vm326
    %v328 = vsel %vm327, %v320, %v324
    %v329 = vand.u32 2147483647, %v319
    %vm330 = vcmp.eq.f32.partialorder %v329, 8.507059e+37
    %v331 = vand.u32 %v319, 2147483648
    %v332 = vor.u32 1.1754944e-38, %v331
    %v333 = vsel %vm330, %v332, %v328
    %v334 = vmul.f32 1.0, %v333
    %v336 = vrot.slane %v254, 1
    %v338 = vadd.f32 %v336, %v293
    %v339 = vxor.u32 %v338, 2147483648
    %v340 = vmul.f32 %v339, 1.442695
    %v341 = vpow.pop %v340
    %v342 = vadd.f32 %v341, 1.0
    %v343 = vrcp.pop %v342
    %v344 = vmul.f32 %v342, %v343
    %v345 = vsub.f32 1.0, %v344
    %v346 = vmul.f32 %v343, %v345
    %v347 = vadd.f32 %v343, %v346
    %vm348 = vweird.f32 %v342
    %vm349 = vweird.f32 %v343
    %vm350 = vmor %vm348, %vm349
    %v351 = vsel %vm350, %v343, %v347
    %v352 = vand.u32 2147483647, %v342
    %vm353 = vcmp.eq.f32.partialorder %v352, 8.507059e+37
    %v354 = vand.u32 %v342, 2147483648
    %v355 = vor.u32 1.1754944e-38, %v354
    %v356 = vsel %vm353, %v355, %v351
    %v357 = vmul.f32 1.0, %v356
    %v358 = vadd.f32 %v313, %v252
    %v359 = vmul.f32 %v334, %v358
    %v360 = vrot.slane %v254, 2
    %v362 = vadd.f32 %v360, %v359
    %v363 = vtanh.pop %v362
    %v364 = vsub.f32 1.0, %v357
    %v365 = vmul.f32 %v364, %v363
    %v366 = vmul.f32 %v357, %v253
    %v367 = vadd.f32 %v365, %v366
    %368 = vst [vmem:[#allocation3] sm:$0x1] %v367
    %s369 = scalar_lea.vmem [#allocation2], 1
    %v370 = vld [vmem:[%s369] ss:$8 sm:$0x7]
    %371 = vmatpush.msra.mxu0 %v249
    %372 = vmatpush.msra.mxu0 %v246
    %373 = vmatpush.msra.mxu0 %v243
    %374 = vmatpush.msra.mxu0 %v240
    %375 = vmatpush.msra.mxu0 %v237
    %376 = vmatpush.msra.mxu0 %v234
    %377 = vmatpush.msra.mxu0 %v231
    %378 = vmatpush.msra.mxu0 %v228
    %379 = vmatpush.msra.mxu0 %v225
    %380 = vmatpush.msra.mxu0 %v222
    %381 = vmatpush.msra.mxu0 %v219
    %382 = vmatpush.msra.mxu0 %v216
    %383 = vmatpush.msra.mxu0 %v213
    %384 = vmatpush.msra.mxu0 %v210
    %385 = vmatpush.msra.mxu0 %v207
    %386 = vmatpush.msra.mxu0 %v204
    %387 = vmatmul.f32.gmra.mxu0 %v367
    %v388 = vpop.f32.mrf.mxu0
    %v389 = vadd.f32 0.0, %v388
    %390 = vdwg.mxu0
    %391 = vmatpush.msra.mxu0 %v250
    %392 = vmatpush.msra.mxu0 %v247
    %393 = vmatpush.msra.mxu0 %v244
    %394 = vmatpush.msra.mxu0 %v241
    %395 = vmatpush.msra.mxu0 %v238
    %396 = vmatpush.msra.mxu0 %v235
    %397 = vmatpush.msra.mxu0 %v232
    %398 = vmatpush.msra.mxu0 %v229
    %399 = vmatpush.msra.mxu0 %v226
    %400 = vmatpush.msra.mxu0 %v223
    %401 = vmatpush.msra.mxu0 %v220
    %402 = vmatpush.msra.mxu0 %v217
    %403 = vmatpush.msra.mxu0 %v214
    %404 = vmatpush.msra.mxu0 %v211
    %405 = vmatpush.msra.mxu0 %v208
    %406 = vmatpush.msra.mxu0 %v205
    %407 = vmatmul.f32.gmra.mxu0 %v367
    %v408 = vpop.f32.mrf.mxu0
    %v409 = vadd.f32 0.0, %v408
    %410 = vdwg.mxu0
    %411 = vmatpush.msra.mxu0 %v251
    %412 = vmatpush.msra.mxu0 %v248
    %413 = vmatpush.msra.mxu0 %v245
    %414 = vmatpush.msra.mxu0 %v242
    %415 = vmatpush.msra.mxu0 %v239
    %416 = vmatpush.msra.mxu0 %v236
    %417 = vmatpush.msra.mxu0 %v233
    %418 = vmatpush.msra.mxu0 %v230
    %419 = vmatpush.msra.mxu0 %v227
    %420 = vmatpush.msra.mxu0 %v224
    %421 = vmatpush.msra.mxu0 %v221
    %422 = vmatpush.msra.mxu0 %v218
    %423 = vmatpush.msra.mxu0 %v215
    %424 = vmatpush.msra.mxu0 %v212
    %425 = vmatpush.msra.mxu0 %v209
    %426 = vmatpush.msra.mxu0 %v206
    %427 = vmatmul.f32.gmra.mxu0 %v367
    %v428 = vpop.f32.mrf.mxu0
    %v429 = vadd.f32 0.0, %v428
    %430 = vdwg.mxu0
    %v431 = vadd.f32 %v370, %v389
    %v432 = vxor.u32 %v431, 2147483648
    %v433 = vmul.f32 %v432, 1.442695
    %v434 = vpow.pop %v433
    %v435 = vadd.f32 %v434, 1.0
    %v436 = vrcp.pop %v435
    %v437 = vmul.f32 %v435, %v436
    %v438 = vsub.f32 1.0, %v437
    %v439 = vmul.f32 %v436, %v438
    %v440 = vadd.f32 %v436, %v439
    %vm441 = vweird.f32 %v435
    %vm442 = vweird.f32 %v436
    %vm443 = vmor %vm441, %vm442
    %v444 = vsel %vm443, %v436, %v440
    %v445 = vand.u32 2147483647, %v435
    %vm446 = vcmp.eq.f32.partialorder %v445, 8.507059e+37
    %v447 = vand.u32 %v435, 2147483648
    %v448 = vor.u32 1.1754944e-38, %v447
    %v449 = vsel %vm446, %v448, %v444
    %v450 = vmul.f32 1.0, %v449
    %v452 = vrot.slane %v370, 1
    %v454 = vadd.f32 %v452, %v409
    %v455 = vxor.u32 %v454, 2147483648
    %v456 = vmul.f32 %v455, 1.442695
    %v457 = vpow.pop %v456
    %v458 = vadd.f32 %v457, 1.0
    %v459 = vrcp.pop %v458
    %v460 = vmul.f32 %v458, %v459
    %v461 = vsub.f32 1.0, %v460
    %v462 = vmul.f32 %v459, %v461
    %v463 = vadd.f32 %v459, %v462
    %vm464 = vweird.f32 %v458
    %vm465 = vweird.f32 %v459
    %vm466 = vmor %vm464, %vm465
    %v467 = vsel %vm466, %v459, %v463
    %v468 = vand.u32 2147483647, %v458
    %vm469 = vcmp.eq.f32.partialorder %v468, 8.507059e+37
    %v470 = vand.u32 %v458, 2147483648
    %v471 = vor.u32 1.1754944e-38, %v470
    %v472 = vsel %vm469, %v471, %v467
    %v473 = vmul.f32 1.0, %v472
    %v474 = vadd.f32 %v429, %v252
    %v475 = vmul.f32 %v450, %v474
    %v476 = vrot.slane %v370, 2
    %v478 = vadd.f32 %v476, %v475
    %v479 = vtanh.pop %v478
    %v480 = vsub.f32 1.0, %v473
    %v481 = vmul.f32 %v480, %v479
    %v482 = vmul.f32 %v473, %v367
    %v483 = vadd.f32 %v481, %v482
    %484 = vst [vmem:[#allocation3 + $0x1] sm:$0x1] %v483
    %s485 = scalar_lea.vmem [#allocation2], 2
    %v486 = vld [vmem:[%s485] ss:$8 sm:$0x7]
    %487 = vmatpush.msra.mxu0 %v249
    %488 = vmatpush.msra.mxu0 %v246
    %489 = vmatpush.msra.mxu0 %v243
    %490 = vmatpush.msra.mxu0 %v240
    %491 = vmatpush.msra.mxu0 %v237
    %492 = vmatpush.msra.mxu0 %v234
    %493 = vmatpush.msra.mxu0 %v231
    %494 = vmatpush.msra.mxu0 %v228
    %495 = vmatpush.msra.mxu0 %v225
    %496 = vmatpush.msra.mxu0 %v222
    %497 = vmatpush.msra.mxu0 %v219
    %498 = vmatpush.msra.mxu0 %v216
    %499 = vmatpush.msra.mxu0 %v213
    %500 = vmatpush.msra.mxu0 %v210
    %501 = vmatpush.msra.mxu0 %v207
    %502 = vmatpush.msra.mxu0 %v204
    %503 = vmatmul.f32.gmra.mxu0 %v483
    %v504 = vpop.f32.mrf.mxu0
    %v505 = vadd.f32 0.0, %v504
    %506 = vdwg.mxu0
    %507 = vmatpush.msra.mxu0 %v250
    %508 = vmatpush.msra.mxu0 %v247
    %509 = vmatpush.msra.mxu0 %v244
    %510 = vmatpush.msra.mxu0 %v241
    %511 = vmatpush.msra.mxu0 %v238
    %512 = vmatpush.msra.mxu0 %v235
    %513 = vmatpush.msra.mxu0 %v232
    %514 = vmatpush.msra.mxu0 %v229
    %515 = vmatpush.msra.mxu0 %v226
    %516 = vmatpush.msra.mxu0 %v223
    %517 = vmatpush.msra.mxu0 %v220
    %518 = vmatpush.msra.mxu0 %v217
    %519 = vmatpush.msra.mxu0 %v214
    %520 = vmatpush.msra.mxu0 %v211
    %521 = vmatpush.msra.mxu0 %v208
    %522 = vmatpush.msra.mxu0 %v205
    %523 = vmatmul.f32.gmra.mxu0 %v483
    %v524 = vpop.f32.mrf.mxu0
    %v525 = vadd.f32 0.0, %v524
    %526 = vdwg.mxu0
    %527 = vmatpush.msra.mxu0 %v251
    %528 = vmatpush.msra.mxu0 %v248
    %529 = vmatpush.msra.mxu0 %v245
    %530 = vmatpush.msra.mxu0 %v242
    %531 = vmatpush.msra.mxu0 %v239
    %532 = vmatpush.msra.mxu0 %v236
    %533 = vmatpush.msra.mxu0 %v233
    %534 = vmatpush.msra.mxu0 %v230
    %535 = vmatpush.msra.mxu0 %v227
    %536 = vmatpush.msra.mxu0 %v224
    %537 = vmatpush.msra.mxu0 %v221
    %538 = vmatpush.msra.mxu0 %v218
    %539 = vmatpush.msra.mxu0 %v215
    %540 = vmatpush.msra.mxu0 %v212
    %541 = vmatpush.msra.mxu0 %v209
    %542 = vmatpush.msra.mxu0 %v206
    %543 = vmatmul.f32.gmra.mxu0 %v483
    %v544 = vpop.f32.mrf.mxu0
    %v545 = vadd.f32 0.0, %v544
    %546 = vdwg.mxu0
    %v547 = vadd.f32 %v486, %v505
    %v548 = vxor.u32 %v547, 2147483648
    %v549 = vmul.f32 %v548, 1.442695
    %v550 = vpow.pop %v549
    %v551 = vadd.f32 %v550, 1.0
    %v552 = vrcp.pop %v551
    %v553 = vmul.f32 %v551, %v552
    %v554 = vsub.f32 1.0, %v553
    %v555 = vmul.f32 %v552, %v554
    %v556 = vadd.f32 %v552, %v555
    %vm557 = vweird.f32 %v551
    %vm558 = vweird.f32 %v552
    %vm559 = vmor %vm557, %vm558
    %v560 = vsel %vm559, %v552, %v556
    %v561 = vand.u32 2147483647, %v551
    %vm562 = vcmp.eq.f32.partialorder %v561, 8.507059e+37
    %v563 = vand.u32 %v551, 2147483648
    %v564 = vor.u32 1.1754944e-38, %v563
    %v565 = vsel %vm562, %v564, %v560
    %v566 = vmul.f32 1.0, %v565
    %v568 = vrot.slane %v486, 1
    %v570 = vadd.f32 %v568, %v525
    %v571 = vxor.u32 %v570, 2147483648
    %v572 = vmul.f32 %v571, 1.442695
    %v573 = vpow.pop %v572
    %v574 = vadd.f32 %v573, 1.0
    %v575 = vrcp.pop %v574
    %v576 = vmul.f32 %v574, %v575
    %v577 = vsub.f32 1.0, %v576
    %v578 = vmul.f32 %v575, %v577
    %v579 = vadd.f32 %v575, %v578
    %vm580 = vweird.f32 %v574
    %vm581 = vweird.f32 %v575
    %vm582 = vmor %vm580, %vm581
    %v583 = vsel %vm582, %v575, %v579
    %v584 = vand.u32 2147483647, %v574
    %vm585 = vcmp.eq.f32.partialorder %v584, 8.507059e+37
    %v586 = vand.u32 %v574, 2147483648
    %v587 = vor.u32 1.1754944e-38, %v586
    %v588 = vsel %vm585, %v587, %v583
    %v589 = vmul.f32 1.0, %v588
    %v590 = vadd.f32 %v545, %v252
    %v591 = vmul.f32 %v566, %v590
    %v592 = vrot.slane %v486, 2
    %v594 = vadd.f32 %v592, %v591
    %v595 = vtanh.pop %v594
    %v596 = vsub.f32 1.0, %v589
    %v597 = vmul.f32 %v596, %v595
    %v598 = vmul.f32 %v589, %v483
    %v599 = vadd.f32 %v597, %v598
    %600 = vst [vmem:[#allocation3 + $0x2] sm:$0x1] %v599
    %s601 = scalar_lea.vmem [#allocation2], 3
    %v602 = vld [vmem:[%s601] ss:$8 sm:$0x7]
    %603 = vmatpush.msra.mxu0 %v249
    %604 = vmatpush.msra.mxu0 %v246
    %605 = vmatpush.msra.mxu0 %v243
    %606 = vmatpush.msra.mxu0 %v240
    %607 = vmatpush.msra.mxu0 %v237
    %608 = vmatpush.msra.mxu0 %v234
    %609 = vmatpush.msra.mxu0 %v231
    %610 = vmatpush.msra.mxu0 %v228
    %611 = vmatpush.msra.mxu0 %v225
    %612 = vmatpush.msra.mxu0 %v222
    %613 = vmatpush.msra.mxu0 %v219
    %614 = vmatpush.msra.mxu0 %v216
    %615 = vmatpush.msra.mxu0 %v213
    %616 = vmatpush.msra.mxu0 %v210
    %617 = vmatpush.msra.mxu0 %v207
    %618 = vmatpush.msra.mxu0 %v204
    %619 = vmatmul.f32.gmra.mxu0 %v599
    %v620 = vpop.f32.mrf.mxu0
    %v621 = vadd.f32 0.0, %v620
    %622 = vdwg.mxu0
    %623 = vmatpush.msra.mxu0 %v250
    %624 = vmatpush.msra.mxu0 %v247
    %625 = vmatpush.msra.mxu0 %v244
    %626 = vmatpush.msra.mxu0 %v241
    %627 = vmatpush.msra.mxu0 %v238
    %628 = vmatpush.msra.mxu0 %v235
    %629 = vmatpush.msra.mxu0 %v232
    %630 = vmatpush.msra.mxu0 %v229
    %631 = vmatpush.msra.mxu0 %v226
    %632 = vmatpush.msra.mxu0 %v223
    %633 = vmatpush.msra.mxu0 %v220
    %634 = vmatpush.msra.mxu0 %v217
    %635 = vmatpush.msra.mxu0 %v214
    %636 = vmatpush.msra.mxu0 %v211
    %637 = vmatpush.msra.mxu0 %v208
    %638 = vmatpush.msra.mxu0 %v205
    %639 = vmatmul.f32.gmra.mxu0 %v599
    %v640 = vpop.f32.mrf.mxu0
    %v641 = vadd.f32 0.0, %v640
    %642 = vdwg.mxu0
    %643 = vmatpush.msra.mxu0 %v251
    %644 = vmatpush.msra.mxu0 %v248
    %645 = vmatpush.msra.mxu0 %v245
    %646 = vmatpush.msra.mxu0 %v242
    %647 = vmatpush.msra.mxu0 %v239
    %648 = vmatpush.msra.mxu0 %v236
    %649 = vmatpush.msra.mxu0 %v233
    %650 = vmatpush.msra.mxu0 %v230
    %651 = vmatpush.msra.mxu0 %v227
    %652 = vmatpush.msra.mxu0 %v224
    %653 = vmatpush.msra.mxu0 %v221
    %654 = vmatpush.msra.mxu0 %v218
    %655 = vmatpush.msra.mxu0 %v215
    %656 = vmatpush.msra.mxu0 %v212
    %657 = vmatpush.msra.mxu0 %v209
    %658 = vmatpush.msra.mxu0 %v206
    %659 = vmatmul.f32.gmra.mxu0 %v599
    %v660 = vpop.f32.mrf.mxu0
    %v661 = vadd.f32 0.0, %v660
    %662 = vdwg.mxu0
    %v663 = vadd.f32 %v602, %v621
    %v664 = vxor.u32 %v663, 2147483648
    %v665 = vmul.f32 %v664, 1.442695
    %v666 = vpow.pop %v665
    %v667 = vadd.f32 %v666, 1.0
    %v668 = vrcp.pop %v667
    %v669 = vmul.f32 %v667, %v668
    %v670 = vsub.f32 1.0, %v669
    %v671 = vmul.f32 %v668, %v670
    %v672 = vadd.f32 %v668, %v671
    %vm673 = vweird.f32 %v667
    %vm674 = vweird.f32 %v668
    %vm675 = vmor %vm673, %vm674
    %v676 = vsel %vm675, %v668, %v672
    %v677 = vand.u32 2147483647, %v667
    %vm678 = vcmp.eq.f32.partialorder %v677, 8.507059e+37
    %v679 = vand.u32 %v667, 2147483648
    %v680 = vor.u32 1.1754944e-38, %v679
    %v681 = vsel %vm678, %v680, %v676
    %v682 = vmul.f32 1.0, %v681
    %v684 = vrot.slane %v602, 1
    %v686 = vadd.f32 %v684, %v641
    %v687 = vxor.u32 %v686, 2147483648
    %v688 = vmul.f32 %v687, 1.442695
    %v689 = vpow.pop %v688
    %v690 = vadd.f32 %v689, 1.0
    %v691 = vrcp.pop %v690
    %v692 = vmul.f32 %v690, %v691
    %v693 = vsub.f32 1.0, %v692
    %v694 = vmul.f32 %v691, %v693
    %v695 = vadd.f32 %v691, %v694
    %vm696 = vweird.f32 %v690
    %vm697 = vweird.f32 %v691
    %vm698 = vmor %vm696, %vm697
    %v699 = vsel %vm698, %v691, %v695
    %v700 = vand.u32 2147483647, %v690
    %vm701 = vcmp.eq.f32.partialorder %v700, 8.507059e+37
    %v702 = vand.u32 %v690, 2147483648
    %v703 = vor.u32 1.1754944e-38, %v702
    %v704 = vsel %vm701, %v703, %v699
    %v705 = vmul.f32 1.0, %v704
    %v706 = vadd.f32 %v661, %v252
    %v707 = vmul.f32 %v682, %v706
    %v708 = vrot.slane %v602, 2
    %v710 = vadd.f32 %v708, %v707
    %v711 = vtanh.pop %v710
    %v712 = vsub.f32 1.0, %v705
    %v713 = vmul.f32 %v712, %v711
    %v714 = vmul.f32 %v705, %v599
    %v715 = vadd.f32 %v713, %v714
    %716 = vst [vmem:[#allocation3 + $0x3] sm:$0x1] %v715
    %s717 = scalar_lea.vmem [#allocation2], 4
    %v718 = vld [vmem:[%s717] ss:$8 sm:$0x7]
    %719 = vmatpush.msra.mxu0 %v249
    %720 = vmatpush.msra.mxu0 %v246
    %721 = vmatpush.msra.mxu0 %v243
    %722 = vmatpush.msra.mxu0 %v240
    %723 = vmatpush.msra.mxu0 %v237
    %724 = vmatpush.msra.mxu0 %v234
    %725 = vmatpush.msra.mxu0 %v231
    %726 = vmatpush.msra.mxu0 %v228
    %727 = vmatpush.msra.mxu0 %v225
    %728 = vmatpush.msra.mxu0 %v222
    %729 = vmatpush.msra.mxu0 %v219
    %730 = vmatpush.msra.mxu0 %v216
    %731 = vmatpush.msra.mxu0 %v213
    %732 = vmatpush.msra.mxu0 %v210
    %733 = vmatpush.msra.mxu0 %v207
    %734 = vmatpush.msra.mxu0 %v204
    %735 = vmatmul.f32.gmra.mxu0 %v715
    %v736 = vpop.f32.mrf.mxu0
    %v737 = vadd.f32 0.0, %v736
    %738 = vdwg.mxu0
    %739 = vmatpush.msra.mxu0 %v250
    %740 = vmatpush.msra.mxu0 %v247
    %741 = vmatpush.msra.mxu0 %v244
    %742 = vmatpush.msra.mxu0 %v241
    %743 = vmatpush.msra.mxu0 %v238
    %744 = vmatpush.msra.mxu0 %v235
    %745 = vmatpush.msra.mxu0 %v232
    %746 = vmatpush.msra.mxu0 %v229
    %747 = vmatpush.msra.mxu0 %v226
    %748 = vmatpush.msra.mxu0 %v223
    %749 = vmatpush.msra.mxu0 %v220
    %750 = vmatpush.msra.mxu0 %v217
    %751 = vmatpush.msra.mxu0 %v214
    %752 = vmatpush.msra.mxu0 %v211
    %753 = vmatpush.msra.mxu0 %v208
    %754 = vmatpush.msra.mxu0 %v205
    %755 = vmatmul.f32.gmra.mxu0 %v715
    %v756 = vpop.f32.mrf.mxu0
    %v757 = vadd.f32 0.0, %v756
    %758 = vdwg.mxu0
    %759 = vmatpush.msra.mxu0 %v251
    %760 = vmatpush.msra.mxu0 %v248
    %761 = vmatpush.msra.mxu0 %v245
    %762 = vmatpush.msra.mxu0 %v242
    %763 = vmatpush.msra.mxu0 %v239
    %764 = vmatpush.msra.mxu0 %v236
    %765 = vmatpush.msra.mxu0 %v233
    %766 = vmatpush.msra.mxu0 %v230
    %767 = vmatpush.msra.mxu0 %v227
    %768 = vmatpush.msra.mxu0 %v224
    %769 = vmatpush.msra.mxu0 %v221
    %770 = vmatpush.msra.mxu0 %v218
    %771 = vmatpush.msra.mxu0 %v215
    %772 = vmatpush.msra.mxu0 %v212
    %773 = vmatpush.msra.mxu0 %v209
    %774 = vmatpush.msra.mxu0 %v206
    %775 = vmatmul.f32.gmra.mxu0 %v715
    %v776 = vpop.f32.mrf.mxu0
    %v777 = vadd.f32 0.0, %v776
    %778 = vdwg.mxu0
    %v779 = vadd.f32 %v718, %v737
    %v780 = vxor.u32 %v779, 2147483648
    %v781 = vmul.f32 %v780, 1.442695
    %v782 = vpow.pop %v781
    %v783 = vadd.f32 %v782, 1.0
    %v784 = vrcp.pop %v783
    %v785 = vmul.f32 %v783, %v784
    %v786 = vsub.f32 1.0, %v785
    %v787 = vmul.f32 %v784, %v786
    %v788 = vadd.f32 %v784, %v787
    %vm789 = vweird.f32 %v783
    %vm790 = vweird.f32 %v784
    %vm791 = vmor %vm789, %vm790
    %v792 = vsel %vm791, %v784, %v788
    %v793 = vand.u32 2147483647, %v783
    %vm794 = vcmp.eq.f32.partialorder %v793, 8.507059e+37
    %v795 = vand.u32 %v783, 2147483648
    %v796 = vor.u32 1.1754944e-38, %v795
    %v797 = vsel %vm794, %v796, %v792
    %v798 = vmul.f32 1.0, %v797
    %v800 = vrot.slane %v718, 1
    %v802 = vadd.f32 %v800, %v757
    %v803 = vxor.u32 %v802, 2147483648
    %v804 = vmul.f32 %v803, 1.442695
    %v805 = vpow.pop %v804
    %v806 = vadd.f32 %v805, 1.0
    %v807 = vrcp.pop %v806
    %v808 = vmul.f32 %v806, %v807
    %v809 = vsub.f32 1.0, %v808
    %v810 = vmul.f32 %v807, %v809
    %v811 = vadd.f32 %v807, %v810
    %vm812 = vweird.f32 %v806
    %vm813 = vweird.f32 %v807
    %vm814 = vmor %vm812, %vm813
    %v815 = vsel %vm814, %v807, %v811
    %v816 = vand.u32 2147483647, %v806
    %vm817 = vcmp.eq.f32.partialorder %v816, 8.507059e+37
    %v818 = vand.u32 %v806, 2147483648
    %v819 = vor.u32 1.1754944e-38, %v818
    %v820 = vsel %vm817, %v819, %v815
    %v821 = vmul.f32 1.0, %v820
    %v822 = vadd.f32 %v777, %v252
    %v823 = vmul.f32 %v798, %v822
    %v824 = vrot.slane %v718, 2
    %v826 = vadd.f32 %v824, %v823
    %v827 = vtanh.pop %v826
    %v828 = vsub.f32 1.0, %v821
    %v829 = vmul.f32 %v828, %v827
    %v830 = vmul.f32 %v821, %v715
    %v831 = vadd.f32 %v829, %v830
    %832 = vst [vmem:[#allocation3 + $0x4] sm:$0x1] %v831
    %s833 = scalar_lea.vmem [#allocation2], 5
    %v834 = vld [vmem:[%s833] ss:$8 sm:$0x7]
    %835 = vmatpush.msra.mxu0 %v249
    %836 = vmatpush.msra.mxu0 %v246
    %837 = vmatpush.msra.mxu0 %v243
    %838 = vmatpush.msra.mxu0 %v240
    %839 = vmatpush.msra.mxu0 %v237
    %840 = vmatpush.msra.mxu0 %v234
    %841 = vmatpush.msra.mxu0 %v231
    %842 = vmatpush.msra.mxu0 %v228
    %843 = vmatpush.msra.mxu0 %v225
    %844 = vmatpush.msra.mxu0 %v222
    %845 = vmatpush.msra.mxu0 %v219
    %846 = vmatpush.msra.mxu0 %v216
    %847 = vmatpush.msra.mxu0 %v213
    %848 = vmatpush.msra.mxu0 %v210
    %849 = vmatpush.msra.mxu0 %v207
    %850 = vmatpush.msra.mxu0 %v204
    %851 = vmatmul.f32.gmra.mxu0 %v831
    %v852 = vpop.f32.mrf.mxu0
    %v853 = vadd.f32 0.0, %v852
    %854 = vdwg.mxu0
    %855 = vmatpush.msra.mxu0 %v250
    %856 = vmatpush.msra.mxu0 %v247
    %857 = vmatpush.msra.mxu0 %v244
    %858 = vmatpush.msra.mxu0 %v241
    %859 = vmatpush.msra.mxu0 %v238
    %860 = vmatpush.msra.mxu0 %v235
    %861 = vmatpush.msra.mxu0 %v232
    %862 = vmatpush.msra.mxu0 %v229
    %863 = vmatpush.msra.mxu0 %v226
    %864 = vmatpush.msra.mxu0 %v223
    %865 = vmatpush.msra.mxu0 %v220
    %866 = vmatpush.msra.mxu0 %v217
    %867 = vmatpush.msra.mxu0 %v214
    %868 = vmatpush.msra.mxu0 %v211
    %869 = vmatpush.msra.mxu0 %v208
    %870 = vmatpush.msra.mxu0 %v205
    %871 = vmatmul.f32.gmra.mxu0 %v831
    %v872 = vpop.f32.mrf.mxu0
    %v873 = vadd.f32 0.0, %v872
    %874 = vdwg.mxu0
    %875 = vmatpush.msra.mxu0 %v251
    %876 = vmatpush.msra.mxu0 %v248
    %877 = vmatpush.msra.mxu0 %v245
    %878 = vmatpush.msra.mxu0 %v242
    %879 = vmatpush.msra.mxu0 %v239
    %880 = vmatpush.msra.mxu0 %v236
    %881 = vmatpush.msra.mxu0 %v233
    %882 = vmatpush.msra.mxu0 %v230
    %883 = vmatpush.msra.mxu0 %v227
    %884 = vmatpush.msra.mxu0 %v224
    %885 = vmatpush.msra.mxu0 %v221
    %886 = vmatpush.msra.mxu0 %v218
    %887 = vmatpush.msra.mxu0 %v215
    %888 = vmatpush.msra.mxu0 %v212
    %889 = vmatpush.msra.mxu0 %v209
    %890 = vmatpush.msra.mxu0 %v206
    %891 = vmatmul.f32.gmra.mxu0 %v831
    %v892 = vpop.f32.mrf.mxu0
    %v893 = vadd.f32 0.0, %v892
    %894 = vdwg.mxu0
    %v895 = vadd.f32 %v834, %v853
    %v896 = vxor.u32 %v895, 2147483648
    %v897 = vmul.f32 %v896, 1.442695
    %v898 = vpow.pop %v897
    %v899 = vadd.f32 %v898, 1.0
    %v900 = vrcp.pop %v899
    %v901 = vmul.f32 %v899, %v900
    %v902 = vsub.f32 1.0, %v901
    %v903 = vmul.f32 %v900, %v902
    %v904 = vadd.f32 %v900, %v903
    %vm905 = vweird.f32 %v899
    %vm906 = vweird.f32 %v900
    %vm907 = vmor %vm905, %vm906
    %v908 = vsel %vm907, %v900, %v904
    %v909 = vand.u32 2147483647, %v899
    %vm910 = vcmp.eq.f32.partialorder %v909, 8.507059e+37
    %v911 = vand.u32 %v899, 2147483648
    %v912 = vor.u32 1.1754944e-38, %v911
    %v913 = vsel %vm910, %v912, %v908
    %v914 = vmul.f32 1.0, %v913
    %v916 = vrot.slane %v834, 1
    %v918 = vadd.f32 %v916, %v873
    %v919 = vxor.u32 %v918, 2147483648
    %v920 = vmul.f32 %v919, 1.442695
    %v921 = vpow.pop %v920
    %v922 = vadd.f32 %v921, 1.0
    %v923 = vrcp.pop %v922
    %v924 = vmul.f32 %v922, %v923
    %v925 = vsub.f32 1.0, %v924
    %v926 = vmul.f32 %v923, %v925
    %v927 = vadd.f32 %v923, %v926
    %vm928 = vweird.f32 %v922
    %vm929 = vweird.f32 %v923
    %vm930 = vmor %vm928, %vm929
    %v931 = vsel %vm930, %v923, %v927
    %v932 = vand.u32 2147483647, %v922
    %vm933 = vcmp.eq.f32.partialorder %v932, 8.507059e+37
    %v934 = vand.u32 %v922, 2147483648
    %v935 = vor.u32 1.1754944e-38, %v934
    %v936 = vsel %vm933, %v935, %v931
    %v937 = vmul.f32 1.0, %v936
    %v938 = vadd.f32 %v893, %v252
    %v939 = vmul.f32 %v914, %v938
    %v940 = vrot.slane %v834, 2
    %v942 = vadd.f32 %v940, %v939
    %v943 = vtanh.pop %v942
    %v944 = vsub.f32 1.0, %v937
    %v945 = vmul.f32 %v944, %v943
    %v946 = vmul.f32 %v937, %v831
    %v947 = vadd.f32 %v945, %v946
    %948 = vst [vmem:[#allocation3 + $0x5] sm:$0x1] %v947
    %s949 = scalar_lea.vmem [#allocation2], 6
    %v950 = vld [vmem:[%s949] ss:$8 sm:$0x7]
    %951 = vmatpush.msra.mxu0 %v249
    %952 = vmatpush.msra.mxu0 %v246
    %953 = vmatpush.msra.mxu0 %v243
    %954 = vmatpush.msra.mxu0 %v240
    %955 = vmatpush.msra.mxu0 %v237
    %956 = vmatpush.msra.mxu0 %v234
    %957 = vmatpush.msra.mxu0 %v231
    %958 = vmatpush.msra.mxu0 %v228
    %959 = vmatpush.msra.mxu0 %v225
    %960 = vmatpush.msra.mxu0 %v222
    %961 = vmatpush.msra.mxu0 %v219
    %962 = vmatpush.msra.mxu0 %v216
    %963 = vmatpush.msra.mxu0 %v213
    %964 = vmatpush.msra.mxu0 %v210
    %965 = vmatpush.msra.mxu0 %v207
    %966 = vmatpush.msra.mxu0 %v204
    %967 = vmatmul.f32.gmra.mxu0 %v947
    %v968 = vpop.f32.mrf.mxu0
    %v969 = vadd.f32 0.0, %v968
    %970 = vdwg.mxu0
    %971 = vmatpush.msra.mxu0 %v250
    %972 = vmatpush.msra.mxu0 %v247
    %973 = vmatpush.msra.mxu0 %v244
    %974 = vmatpush.msra.mxu0 %v241
    %975 = vmatpush.msra.mxu0 %v238
    %976 = vmatpush.msra.mxu0 %v235
    %977 = vmatpush.msra.mxu0 %v232
    %978 = vmatpush.msra.mxu0 %v229
    %979 = vmatpush.msra.mxu0 %v226
    %980 = vmatpush.msra.mxu0 %v223
    %981 = vmatpush.msra.mxu0 %v220
    %982 = vmatpush.msra.mxu0 %v217
    %983 = vmatpush.msra.mxu0 %v214
    %984 = vmatpush.msra.mxu0 %v211
    %985 = vmatpush.msra.mxu0 %v208
    %986 = vmatpush.msra.mxu0 %v205
    %987 = vmatmul.f32.gmra.mxu0 %v947
    %v988 = vpop.f32.mrf.mxu0
    %v989 = vadd.f32 0.0, %v988
    %990 = vdwg.mxu0
    %991 = vmatpush.msra.mxu0 %v251
    %992 = vmatpush.msra.mxu0 %v248
    %993 = vmatpush.msra.mxu0 %v245
    %994 = vmatpush.msra.mxu0 %v242
    %995 = vmatpush.msra.mxu0 %v239
    %996 = vmatpush.msra.mxu0 %v236
    %997 = vmatpush.msra.mxu0 %v233
    %998 = vmatpush.msra.mxu0 %v230
    %999 = vmatpush.msra.mxu0 %v227
    %1000 = vmatpush.msra.mxu0 %v224
    %1001 = vmatpush.msra.mxu0 %v221
    %1002 = vmatpush.msra.mxu0 %v218
    %1003 = vmatpush.msra.mxu0 %v215
    %1004 = vmatpush.msra.mxu0 %v212
    %1005 = vmatpush.msra.mxu0 %v209
    %1006 = vmatpush.msra.mxu0 %v206
    %1007 = vmatmul.f32.gmra.mxu0 %v947
    %v1008 = vpop.f32.mrf.mxu0
    %v1009 = vadd.f32 0.0, %v1008
    %1010 = vdwg.mxu0
    %v1011 = vadd.f32 %v950, %v969
    %v1012 = vxor.u32 %v1011, 2147483648
    %v1013 = vmul.f32 %v1012, 1.442695
    %v1014 = vpow.pop %v1013
    %v1015 = vadd.f32 %v1014, 1.0
    %v1016 = vrcp.pop %v1015
    %v1017 = vmul.f32 %v1015, %v1016
    %v1018 = vsub.f32 1.0, %v1017
    %v1019 = vmul.f32 %v1016, %v1018
    %v1020 = vadd.f32 %v1016, %v1019
    %vm1021 = vweird.f32 %v1015
    %vm1022 = vweird.f32 %v1016
    %vm1023 = vmor %vm1021, %vm1022
    %v1024 = vsel %vm1023, %v1016, %v1020
    %v1025 = vand.u32 2147483647, %v1015
    %vm1026 = vcmp.eq.f32.partialorder %v1025, 8.507059e+37
    %v1027 = vand.u32 %v1015, 2147483648
    %v1028 = vor.u32 1.1754944e-38, %v1027
    %v1029 = vsel %vm1026, %v1028, %v1024
    %v1030 = vmul.f32 1.0, %v1029
    %v1032 = vrot.slane %v950, 1
    %v1034 = vadd.f32 %v1032, %v989
    %v1035 = vxor.u32 %v1034, 2147483648
    %v1036 = vmul.f32 %v1035, 1.442695
    %v1037 = vpow.pop %v1036
    %v1038 = vadd.f32 %v1037, 1.0
    %v1039 = vrcp.pop %v1038
    %v1040 = vmul.f32 %v1038, %v1039
    %v1041 = vsub.f32 1.0, %v1040
    %v1042 = vmul.f32 %v1039, %v1041
    %v1043 = vadd.f32 %v1039, %v1042
    %vm1044 = vweird.f32 %v1038
    %vm1045 = vweird.f32 %v1039
    %vm1046 = vmor %vm1044, %vm1045
    %v1047 = vsel %vm1046, %v1039, %v1043
    %v1048 = vand.u32 2147483647, %v1038
    %vm1049 = vcmp.eq.f32.partialorder %v1048, 8.507059e+37
    %v1050 = vand.u32 %v1038, 2147483648
    %v1051 = vor.u32 1.1754944e-38, %v1050
    %v1052 = vsel %vm1049, %v1051, %v1047
    %v1053 = vmul.f32 1.0, %v1052
    %v1054 = vadd.f32 %v1009, %v252
    %v1055 = vmul.f32 %v1030, %v1054
    %v1056 = vrot.slane %v950, 2
    %v1058 = vadd.f32 %v1056, %v1055
    %v1059 = vtanh.pop %v1058
    %v1060 = vsub.f32 1.0, %v1053
    %v1061 = vmul.f32 %v1060, %v1059
    %v1062 = vmul.f32 %v1053, %v947
    %v1063 = vadd.f32 %v1061, %v1062
    %1064 = vst [vmem:[#allocation3 + $0x6] sm:$0x1] %v1063
    %s1065 = scalar_lea.vmem [#allocation2], 7
    %v1066 = vld [vmem:[%s1065] ss:$8 sm:$0x7]
    %1067 = vmatpush.msra.mxu0 %v249
    %1068 = vmatpush.msra.mxu0 %v246
    %1069 = vmatpush.msra.mxu0 %v243
    %1070 = vmatpush.msra.mxu0 %v240
    %1071 = vmatpush.msra.mxu0 %v237
    %1072 = vmatpush.msra.mxu0 %v234
    %1073 = vmatpush.msra.mxu0 %v231
    %1074 = vmatpush.msra.mxu0 %v228
    %1075 = vmatpush.msra.mxu0 %v225
    %1076 = vmatpush.msra.mxu0 %v222
    %1077 = vmatpush.msra.mxu0 %v219
    %1078 = vmatpush.msra.mxu0 %v216
    %1079 = vmatpush.msra.mxu0 %v213
    %1080 = vmatpush.msra.mxu0 %v210
    %1081 = vmatpush.msra.mxu0 %v207
    %1082 = vmatpush.msra.mxu0 %v204
    %1083 = vmatmul.f32.gmra.mxu0 %v1063
    %v1084 = vpop.f32.mrf.mxu0
    %v1085 = vadd.f32 0.0, %v1084
    %1086 = vdwg.mxu0
    %1087 = vmatpush.msra.mxu0 %v250
    %1088 = vmatpush.msra.mxu0 %v247
    %1089 = vmatpush.msra.mxu0 %v244
    %1090 = vmatpush.msra.mxu0 %v241
    %1091 = vmatpush.msra.mxu0 %v238
    %1092 = vmatpush.msra.mxu0 %v235
    %1093 = vmatpush.msra.mxu0 %v232
    %1094 = vmatpush.msra.mxu0 %v229
    %1095 = vmatpush.msra.mxu0 %v226
    %1096 = vmatpush.msra.mxu0 %v223
    %1097 = vmatpush.msra.mxu0 %v220
    %1098 = vmatpush.msra.mxu0 %v217
    %1099 = vmatpush.msra.mxu0 %v214
    %1100 = vmatpush.msra.mxu0 %v211
    %1101 = vmatpush.msra.mxu0 %v208
    %1102 = vmatpush.msra.mxu0 %v205
    %1103 = vmatmul.f32.gmra.mxu0 %v1063
    %v1104 = vpop.f32.mrf.mxu0
    %v1105 = vadd.f32 0.0, %v1104
    %1106 = vdwg.mxu0
    %1107 = vmatpush.msra.mxu0 %v251
    %1108 = vmatpush.msra.mxu0 %v248
    %1109 = vmatpush.msra.mxu0 %v245
    %1110 = vmatpush.msra.mxu0 %v242
    %1111 = vmatpush.msra.mxu0 %v239
    %1112 = vmatpush.msra.mxu0 %v236
    %1113 = vmatpush.msra.mxu0 %v233
    %1114 = vmatpush.msra.mxu0 %v230
    %1115 = vmatpush.msra.mxu0 %v227
    %1116 = vmatpush.msra.mxu0 %v224
    %1117 = vmatpush.msra.mxu0 %v221
    %1118 = vmatpush.msra.mxu0 %v218
    %1119 = vmatpush.msra.mxu0 %v215
    %1120 = vmatpush.msra.mxu0 %v212
    %1121 = vmatpush.msra.mxu0 %v209
    %1122 = vmatpush.msra.mxu0 %v206
    %1123 = vmatmul.f32.gmra.mxu0 %v1063
    %v1124 = vpop.f32.mrf.mxu0
    %v1125 = vadd.f32 0.0, %v1124
    %1126 = vdwg.mxu0
    %v1127 = vadd.f32 %v1066, %v1085
    %v1128 = vxor.u32 %v1127, 2147483648
    %v1129 = vmul.f32 %v1128, 1.442695
    %v1130 = vpow.pop %v1129
    %v1131 = vadd.f32 %v1130, 1.0
    %v1132 = vrcp.pop %v1131
    %v1133 = vmul.f32 %v1131, %v1132
    %v1134 = vsub.f32 1.0, %v1133
    %v1135 = vmul.f32 %v1132, %v1134
    %v1136 = vadd.f32 %v1132, %v1135
    %vm1137 = vweird.f32 %v1131
    %vm1138 = vweird.f32 %v1132
    %vm1139 = vmor %vm1137, %vm1138
    %v1140 = vsel %vm1139, %v1132, %v1136
    %v1141 = vand.u32 2147483647, %v1131
    %vm1142 = vcmp.eq.f32.partialorder %v1141, 8.507059e+37
    %v1143 = vand.u32 %v1131, 2147483648
    %v1144 = vor.u32 1.1754944e-38, %v1143
    %v1145 = vsel %vm1142, %v1144, %v1140
    %v1146 = vmul.f32 1.0, %v1145
    %v1148 = vrot.slane %v1066, 1
    %v1150 = vadd.f32 %v1148, %v1105
    %v1151 = vxor.u32 %v1150, 2147483648
    %v1152 = vmul.f32 %v1151, 1.442695
    %v1153 = vpow.pop %v1152
    %v1154 = vadd.f32 %v1153, 1.0
    %v1155 = vrcp.pop %v1154
    %v1156 = vmul.f32 %v1154, %v1155
    %v1157 = vsub.f32 1.0, %v1156
    %v1158 = vmul.f32 %v1155, %v1157
    %v1159 = vadd.f32 %v1155, %v1158
    %vm1160 = vweird.f32 %v1154
    %vm1161 = vweird.f32 %v1155
    %vm1162 = vmor %vm1160, %vm1161
    %v1163 = vsel %vm1162, %v1155, %v1159
    %v1164 = vand.u32 2147483647, %v1154
    %vm1165 = vcmp.eq.f32.partialorder %v1164, 8.507059e+37
    %v1166 = vand.u32 %v1154, 2147483648
    %v1167 = vor.u32 1.1754944e-38, %v1166
    %v1168 = vsel %vm1165, %v1167, %v1163
    %v1169 = vmul.f32 1.0, %v1168
    %v1170 = vadd.f32 %v1125, %v252
    %v1171 = vmul.f32 %v1146, %v1170
    %v1172 = vrot.slane %v1066, 2
    %v1174 = vadd.f32 %v1172, %v1171
    %v1175 = vtanh.pop %v1174
    %v1176 = vsub.f32 1.0, %v1169
    %v1177 = vmul.f32 %v1176, %v1175
    %v1178 = vmul.f32 %v1169, %v1063
    %v1179 = vadd.f32 %v1177, %v1178
    %1180 = vst [vmem:[#allocation3 + $0x7] sm:$0x1] %v1179
    %1181 = vst [vmem:[#allocation11] sm:$0x1] %v1179
    %v1182 = vld [vmem:[#allocation3] sm:$0xff]
    %v1183 = vld [vmem:[#allocation7] sm:$0xff]
    %v1184 = vld [vmem:[#allocation7 + $0x8] sm:$0xff]
    %v1185 = vld [vmem:[#allocation7 + $0x10] sm:$0xff]
    %v1186 = vld [vmem:[#allocation7 + $0x18] sm:$0xff]
    %v1187 = vld [vmem:[#allocation7 + $0x20] sm:$0xff]
    %v1188 = vld [vmem:[#allocation7 + $0x28] sm:$0xff]
    %v1189 = vld [vmem:[#allocation7 + $0x30] sm:$0xff]
    %v1190 = vld [vmem:[#allocation7 + $0x38] sm:$0xff]
    %v1191 = vld [vmem:[#allocation7 + $0x40] sm:$0xff]
    %v1192 = vld [vmem:[#allocation7 + $0x48] sm:$0xff]
    %v1193 = vld [vmem:[#allocation7 + $0x50] sm:$0xff]
    %v1194 = vld [vmem:[#allocation7 + $0x58] sm:$0xff]
    %v1195 = vld [vmem:[#allocation7 + $0x60] sm:$0xff]
    %v1196 = vld [vmem:[#allocation7 + $0x68] sm:$0xff]
    %v1197 = vld [vmem:[#allocation7 + $0x70] sm:$0xff]
    %v1198 = vld [vmem:[#allocation7 + $0x78] sm:$0xff]
    %v1199 = vld [vmem:[#allocation9 + $0x2] ss:$0 sm:$0xff]
    %1200 = vmatpush.msra.mxu0 %v1198
    %1201 = vmatpush.msra.mxu0 %v1197
    %1202 = vmatpush.msra.mxu0 %v1196
    %1203 = vmatpush.msra.mxu0 %v1195
    %1204 = vmatpush.msra.mxu0 %v1194
    %1205 = vmatpush.msra.mxu0 %v1193
    %1206 = vmatpush.msra.mxu0 %v1192
    %1207 = vmatpush.msra.mxu0 %v1191
    %1208 = vmatpush.msra.mxu0 %v1190
    %1209 = vmatpush.msra.mxu0 %v1189
    %1210 = vmatpush.msra.mxu0 %v1188
    %1211 = vmatpush.msra.mxu0 %v1187
    %1212 = vmatpush.msra.mxu0 %v1186
    %1213 = vmatpush.msra.mxu0 %v1185
    %1214 = vmatpush.msra.mxu0 %v1184
    %1215 = vmatpush.msra.mxu0 %v1183
    %1216 = vmatmul.f32.gmra.mxu0 %v1182
    %v1217 = vpop.f32.mrf.mxu0
    %v1218 = vadd.f32 %v1199, %v1217
    %1219 = vdwg.mxu0
    %1220 = vmax.xlane.f32.xlu0 %v1218
    %v1221 = vpop.xlane.xlu0 %1220
    %v1222 = vsub.f32 %v1218, %v1221
    %v1223 = vmul.f32 %v1222, 1.442695
    %v1224 = vpow.pop %v1223
    %1225 = vadd.xlane.f32.xlu0 %v1224
    %v1226 = vpop.xlane.xlu0 %1225
    %v1227 = vlog2.pop %v1226
    %v1228 = vmul.f32 %v1227, 0.6931472
    %v1229 = vadd.f32 %v1228, %v1221
    %v1230 = vsub.f32 %v1218, %v1229
    %1231 = vst [vmem:[#allocation10] sm:$0xff] %v1230
    // Predicated region
    $region42: #{tpu_custom_call.1} parent=1 // pred_check
      _
    $region43: #{tpu_custom_call.1} parent=1 // pred_check_branch
      %1233 = sbr.rel (0) target = $region45
    $region44: #{tpu_custom_call.1} parent=1 // pred_region
      %1235 = vsyncadd [#allocation6], 0
      %s1237 = sshll.u32 [#allocation10], 4
      %s1238 = int_to_ptr.vmem [resolvable:$true] %s1237
      %s1239 = sshll.u32 %s7, 4
      %s1240 = int_to_ptr.hbm [resolvable:$true] %s1239
      %1242 = dma.vmem_to_hbm [thread:$0]  %s1238, 128, %s1240, [#allocation6]
    $region45: #{tpu_custom_call.1} parent=1 // pred_fallthru
      _
    // Predicated region
    $region46: #{tpu_custom_call.1} parent=1 // pred_check
      _
    $region47: #{tpu_custom_call.1} parent=1 // pred_check_branch
      %1244 = sbr.rel (0) target = $region49
    $region48: #{tpu_custom_call.1} parent=1 // pred_region
      %1246 = vsyncadd [#allocation12], 0
      %s1248 = sshll.u32 [#allocation11], 4
      %s1249 = int_to_ptr.vmem [resolvable:$true] %s1248
      %s1250 = sshll.u32 %s8, 4
      %s1251 = int_to_ptr.hbm [resolvable:$true] %s1250
      %1253 = dma.vmem_to_hbm [thread:$0]  %s1249, 16, %s1251, [#allocation12]
    $region49: #{tpu_custom_call.1} parent=1 // pred_fallthru
      _
    // Predicated region
    $region50: #{tpu_custom_call.1} parent=1 // pred_check
      _
    $region51: #{tpu_custom_call.1} parent=1 // pred_check_branch
      %1255 = sbr.rel (0) target = $region53
    $region52: #{tpu_custom_call.1} parent=1 // pred_region
      %1257 = dma.done [#allocation6], 128
    $region53: #{tpu_custom_call.1} parent=1 // pred_fallthru
      _
    // Predicated region
    $region54: #{tpu_custom_call.1} parent=1 // pred_check
      _
    $region55: #{tpu_custom_call.1} parent=1 // pred_check_branch
      %1259 = sbr.rel (0) target = $region57
    $region56: #{tpu_custom_call.1} parent=1 // pred_region
      %1261 = dma.done [#allocation12], 16
    $region57: #{tpu_custom_call.1} parent=1 // pred_fallthru
      _
    %1262 = vsyncpa [#allocation5], 1
    %1263 = vsyncpa [#allocation8], 1
    %1264 = vsyncpa [#allocation6], 1
    %1265 = vsyncpa [#allocation12], 1

</llo_original>
